<compile_context>
chip_gen: v6e
topology: v6e:2x2x1
jax: 0.10.0
libtpu: 0.0.40
codegen_flags: <defaults>
</compile_context>

<pallas_src>
from functools import partial

import jax
import jax.numpy as jnp
from jax import lax
from jax.experimental import pallas as pl
from jax.experimental.pallas import tpu as pltpu

# ---------------- small synthetic config ----------------
SAMPLE_RATE = 16000
N_FFT = 256
HOP = 128
N_MELS = 64
FMIN = 50.0
FMAX = 8000.0
TOP_DB = 80.0
POWER = 2.0
WAV_LEN = 1920          # -> 1 + 1920//128 = 16 time frames (center padding)
PARTS = 4               # eval-mode "parts" acts as the effective batch (rows = 256)
N_CLASSES = 8
PATCH = 4               # backbone stand-in patch size
BACKBONE_OUT = 128      # stand-in backbone feature channels
ATT_HIDDEN = 512
EPS_IN = 1e-5           # InstanceNorm2d default eps
LANES = 128             # lane-dense output width


# ---------------- plain-JAX glue: MelSpectrogram + AmplitudeToDB + bn0 ----------------
def _hz_to_mel(f):
    return 2595.0 * jnp.log10(1.0 + f / 700.0)


def _mel_to_hz(m):
    return 700.0 * (10.0 ** (m / 2595.0) - 1.0)


def _mel_filterbank(n_freqs, n_mels, sample_rate, f_min, f_max):
    all_freqs = jnp.linspace(0.0, sample_rate / 2.0, n_freqs)
    m_pts = jnp.linspace(_hz_to_mel(f_min), _hz_to_mel(f_max), n_mels + 2)
    f_pts = _mel_to_hz(m_pts)
    f_diff = f_pts[1:] - f_pts[:-1]
    slopes = f_pts[None, :] - all_freqs[:, None]           # (n_freqs, n_mels+2)
    down = -slopes[:, :-2] / f_diff[:-1]
    up = slopes[:, 2:] / f_diff[1:]
    return jnp.maximum(0.0, jnp.minimum(down, up))          # (n_freqs, n_mels)


def wav_to_logmel(wav):
    """torchaudio.MelSpectrogram(center=True, hann, power=2) + AmplitudeToDB(top_db)."""
    pad = N_FFT // 2
    xp = jnp.pad(wav, ((0, 0), (pad, pad)), mode="reflect")
    n_frames = 1 + (xp.shape[1] - N_FFT) // HOP
    idx = jnp.arange(n_frames)[:, None] * HOP + jnp.arange(N_FFT)[None, :]
    frames = xp[:, idx]                                      # (B, frames, n_fft)
    window = 0.5 - 0.5 * jnp.cos(2.0 * jnp.pi * jnp.arange(N_FFT) / N_FFT)
    spec = jnp.abs(jnp.fft.rfft(frames * window, axis=-1)) ** POWER   # (B, frames, nfreq)
    fb = _mel_filterbank(N_FFT // 2 + 1, N_MELS, SAMPLE_RATE, FMIN, FMAX)
    mel = spec @ fb                                           # (B, frames, n_mels)
    mel = jnp.transpose(mel, (0, 2, 1))                       # (B, n_mels, frames)
    db = 10.0 * jnp.log10(jnp.maximum(mel, 1e-10))
    # TODO(synk): torchaudio applies the top_db clamp per channel; per sample here.
    db = jnp.maximum(db, jnp.max(db, axis=(1, 2), keepdims=True) - TOP_DB)
    return db


# ---------------- single fused Pallas kernel ----------------
def _fused_net_kernel(patch_ref, y_ref, wp_ref, bp_ref, w1_ref, b1_ref,
                      w2_ref, b2_ref, wh_ref, bh_ref, prob_ref, loss_ref,
                      *, n_parts, t_blocks, f_blocks, n_classes):
    # ---- backbone stand-in: 4x4 patch embedding as one tile-aligned MXU matmul
    #      (B*HW, P*P) @ (P*P, C) = (256,16)@(16,128), bf16 inputs / f32 accumulate. ----
    # TODO(synk): the timm CNN backbone is replaced by this deterministic patch-embed stand-in.
    feat = jnp.dot(patch_ref[...], wp_ref[...],
                   preferred_element_type=jnp.float32) + bp_ref[...]     # (B*HW, C) f32

    # ---- x.mean(3) + permute(0,2,1): mean over frequency blocks as a sublane
    #      reduce (reshape + mean) — no mask build, no f32 MXU pooling matmul. ----
    bt = n_parts * t_blocks                                   # B*T' = 16
    c = feat.shape[-1]
    x = jnp.mean(feat.reshape(bt, f_blocks, c), axis=1)       # (B*T', C) = (16,128) f32

    # ---- att = Linear(C,512) -> ReLU -> Linear(512,1) ----
    h = jnp.maximum(
        jnp.dot(x.astype(jnp.bfloat16), w1_ref[...],
                preferred_element_type=jnp.float32) + b1_ref[...], 0.0)  # (B*T', 512) f32
    # 512 -> 1 projection as VPU multiply + lane reduce (avoids an N=1 MXU matmul)
    s = jnp.sum(h * w2_ref[...], axis=-1, keepdims=True) + b2_ref[...]   # (B*T', 1)

    # ---- per-part softmax over time + attention pooling x2 = (x * att).sum(1) ----
    srow = lax.broadcasted_iota(jnp.int32, (bt, 1), 0)
    crow = lax.broadcasted_iota(jnp.int32, (n_parts, c), 0)
    x2 = jnp.zeros((n_parts, c), jnp.float32)
    for b in range(n_parts):                                  # static unroll (small B)
        in_part = (srow >= b * t_blocks) & (srow < (b + 1) * t_blocks)
        sb = jnp.where(in_part, s, -1e30)
        e = jnp.where(in_part, jnp.exp(sb - jnp.max(sb)), 0.0)
        att = e * pl.reciprocal(jnp.sum(e, axis=0, keepdims=True), approx=True)
        x2_b = jnp.sum(x * att, axis=0, keepdims=True)        # (1, C)
        x2 = jnp.where(crow == b, x2_b, x2)

    # ---- head linear (lane-padded to 128, bf16 MXU), sigmoid ----
    logits = jnp.dot(x2.astype(jnp.bfloat16), wh_ref[...],
                     preferred_element_type=jnp.float32) + bh_ref[...]   # (B, 128)
    prob_ref[...] = jax.nn.sigmoid(logits)                    # lane-dense 128-wide store

    # ---- BCEWithLogitsLoss (mean) reduced fully in-kernel -> (1,1) SMEM scalar ----
    lc = logits[:, :n_classes]                                # (B, n_classes)
    y = y_ref[...]                                            # (B, n_classes)
    bce = jnp.maximum(lc, 0.0) - lc * y + jnp.log1p(jnp.exp(-jnp.abs(lc)))
    loss_ref[0, 0] = jnp.sum(bce) * (1.0 / float(n_parts * n_classes))


# ---------------- forward ----------------
def net_forward(params, wav, target):
    """wav: (parts, time) f32 ; target: (parts, n_classes) f32."""
    # wav2img (FFT based) has no Pallas equivalent — plain-JAX glue.
    mel_db = wav_to_logmel(wav)                               # (B, n_mels, frames)
    x = jnp.transpose(mel_db, (0, 2, 1))                      # permute(0,2,1) -> (B, frames, n_mels)
    B, H, W = x.shape

    # bn0 = InstanceNorm2d(1): fused into the XLA log-mel pipeline (lane-dense here,
    # merges with the existing transpose/reshape) per perf review.
    mean = jnp.mean(x, axis=(1, 2), keepdims=True)
    var = jnp.mean((x - mean) ** 2, axis=(1, 2), keepdims=True)
    xn = (x - mean) * lax.rsqrt(var + EPS_IN)

    # patchify (pure data movement) + bf16 cast fuse with the log-mel XLA ops.
    hp, fp = H // PATCH, W // PATCH
    patches = (xn.reshape(B, hp, PATCH, fp, PATCH)
                 .transpose(0, 1, 3, 2, 4)
                 .reshape(B * hp * fp, PATCH * PATCH)
                 .astype(jnp.bfloat16))                       # (B*HW, P*P) = (256, 16)

    kernel = partial(_fused_net_kernel, n_parts=B, t_blocks=hp,
                     f_blocks=fp, n_classes=N_CLASSES)
    # Grid-less single call: workload is launch-latency bound; all parts stacked on
    # the row axis.  (A "parallel" clip grid axis for v7x's 2 TCs only pays once
    # many more clips are batched per call.)
    prob_pad, loss = pl.pallas_call(
        kernel,
        out_shape=(jax.ShapeDtypeStruct((B, LANES), jnp.float32),
                   jax.ShapeDtypeStruct((1, 1), jnp.float32)),
        out_specs=(pl.BlockSpec(memory_space=pltpu.MemorySpace.VMEM),
                   pl.BlockSpec(memory_space=pltpu.MemorySpace.SMEM)),
    )(patches, target,
      params["wp"], params["bp"],
      params["w1"], params["b1"],
      params["w2"], params["b2"],
      params["wh_pad"], params["bh_pad"])

    prob = prob_pad[:, :N_CLASSES]                            # (B, n_classes)
    return {"loss": loss[0, 0], "logits": prob, "target": target}


# ---------------- deterministic parameter init (all per-call prep hoisted here) ----------------
def init_params(key):
    ks = jax.random.split(key, 4)

    def lin(k, fan_in, fan_out):
        bound = 1.0 / (fan_in ** 0.5)
        kw, kb = jax.random.split(k)
        w = jax.random.uniform(kw, (fan_in, fan_out), jnp.float32, -bound, bound)
        b = jax.random.uniform(kb, (1, fan_out), jnp.float32, -bound, bound)
        return w, b

    wp, bp = lin(ks[0], PATCH * PATCH, BACKBONE_OUT)          # backbone stand-in
    w1, b1 = lin(ks[1], BACKBONE_OUT, ATT_HIDDEN)             # att[0]
    w2, b2 = lin(ks[2], ATT_HIDDEN, 1)                        # att[2]
    wh, bh = lin(ks[3], BACKBONE_OUT, N_CLASSES)              # head

    # Hoisted prep: bf16 MXU operands, w2 as a (1,512) row, head lane-padded to 128.
    wh_pad = jnp.zeros((BACKBONE_OUT, LANES), jnp.float32).at[:, :N_CLASSES].set(wh)
    bh_pad = jnp.zeros((1, LANES), jnp.float32).at[:, :N_CLASSES].set(bh)
    return dict(
        wp=wp.astype(jnp.bfloat16), bp=bp,
        w1=w1.astype(jnp.bfloat16), b1=b1,
        w2=jnp.transpose(w2), b2=b2,
        wh_pad=wh_pad.astype(jnp.bfloat16), bh_pad=bh_pad)


if __name__ == "__main__":
    key = jax.random.PRNGKey(0)
    kp, kx, ky = jax.random.split(key, 3)
    params = init_params(kp)

    # eval-path batch: input (bs=1, parts, time), target (bs=1, parts, n_classes)
    x_in = jax.random.normal(kx, (1, PARTS, WAV_LEN), jnp.float32)
    y_in = (jax.random.uniform(ky, (1, PARTS, N_CLASSES)) > 0.5).astype(jnp.float32)

    wav = x_in.reshape(PARTS, WAV_LEN)                        # x.reshape(parts, time)
    target = y_in[0]                                          # y = y[0]

    out = jax.jit(net_forward)(params, wav, target)
    jax.block_until_ready(out)

    assert out["logits"].shape == (PARTS, N_CLASSES)
    assert out["loss"].shape == ()
    assert bool(jnp.all(jnp.isfinite(out["logits"]))) and bool(jnp.isfinite(out["loss"]))
    print("KERNEL_OK")
</pallas_src>

<mosaic_0001>
module attributes {stable_mosaic.version = 11 : i64} {
  func.func @_fused_net_kernel(%arg0: memref<256x16xbf16, #tpu.memory_space<vmem>>, %arg1: memref<4x8xf32, #tpu.memory_space<vmem>>, %arg2: memref<16x128xbf16, #tpu.memory_space<vmem>>, %arg3: memref<1x128xf32, #tpu.memory_space<vmem>>, %arg4: memref<128x512xbf16, #tpu.memory_space<vmem>>, %arg5: memref<1x512xf32, #tpu.memory_space<vmem>>, %arg6: memref<1x512xf32, #tpu.memory_space<vmem>>, %arg7: memref<1x1xf32, #tpu.memory_space<vmem>>, %arg8: memref<128x128xbf16, #tpu.memory_space<vmem>>, %arg9: memref<1x128xf32, #tpu.memory_space<vmem>>, %arg10: memref<4x128xf32, #tpu.memory_space<vmem>>, %arg11: memref<1x1xf32, #tpu.memory_space<smem>>) attributes {dimension_semantics = [], scalar_prefetch = 0 : i64, scratch_operands = 0 : i64, tpu.core_type = #tpu.core_type<tc>} {
    %c0 = arith.constant 0 : index
    %c0_0 = arith.constant 0 : index
    %0 = vector.load %arg0[%c0, %c0_0] : memref<256x16xbf16, #tpu.memory_space<vmem>>, vector<256x16xbf16>
    %c0_1 = arith.constant 0 : index
    %c0_2 = arith.constant 0 : index
    %1 = vector.load %arg2[%c0_1, %c0_2] : memref<16x128xbf16, #tpu.memory_space<vmem>>, vector<16x128xbf16>
    %cst = arith.constant dense<0.000000e+00> : vector<256x128xf32>
    %2 = tpu.matmul %0, %1, %cst {dimension_numbers = #tpu.dot_dimension_numbers<[1], [0], [0], [1], [0, 0, 1, 1], [], []>} : vector<256x16xbf16>, vector<16x128xbf16>, vector<256x128xf32> -> vector<256x128xf32>
    %c0_3 = arith.constant 0 : index
    %c0_4 = arith.constant 0 : index
    %3 = vector.load %arg3[%c0_3, %c0_4] : memref<1x128xf32, #tpu.memory_space<vmem>>, vector<1x128xf32>
    %4 = vector.broadcast %3 : vector<1x128xf32> to vector<256x128xf32>
    %5 = arith.addf %2, %4 : vector<256x128xf32>
    %6 = vector.shape_cast %5 : vector<256x128xf32> to vector<16x16x128xf32>
    %cst_5 = arith.constant dense<0.000000e+00> : vector<16x128xf32>
    %7 = vector.multi_reduction <add>, %6, %cst_5 [1] : vector<16x16x128xf32> to vector<16x128xf32>
    %cst_6 = arith.constant 1.600000e+01 : f32
    %8 = vector.broadcast %cst_6 : f32 to vector<16x128xf32>
    %9 = arith.divf %7, %8 : vector<16x128xf32>
    %10 = arith.truncf %9 : vector<16x128xf32> to vector<16x128xbf16>
    %c0_7 = arith.constant 0 : index
    %c0_8 = arith.constant 0 : index
    %11 = vector.load %arg4[%c0_7, %c0_8] : memref<128x512xbf16, #tpu.memory_space<vmem>>, vector<128x512xbf16>
    %cst_9 = arith.constant dense<0.000000e+00> : vector<16x512xf32>
    %12 = tpu.matmul %10, %11, %cst_9 {dimension_numbers = #tpu.dot_dimension_numbers<[1], [0], [0], [1], [0, 0, 1, 1], [], []>} : vector<16x128xbf16>, vector<128x512xbf16>, vector<16x512xf32> -> vector<16x512xf32>
    %c0_10 = arith.constant 0 : index
    %c0_11 = arith.constant 0 : index
    %13 = vector.load %arg5[%c0_10, %c0_11] : memref<1x512xf32, #tpu.memory_space<vmem>>, vector<1x512xf32>
    %14 = vector.broadcast %13 : vector<1x512xf32> to vector<16x512xf32>
    %15 = arith.addf %12, %14 : vector<16x512xf32>
    %cst_12 = arith.constant 0.000000e+00 : f32
    %16 = vector.broadcast %cst_12 : f32 to vector<16x512xf32>
    %17 = arith.maximumf %15, %16 : vector<16x512xf32>
    %c0_13 = arith.constant 0 : index
    %c0_14 = arith.constant 0 : index
    %18 = vector.load %arg6[%c0_13, %c0_14] : memref<1x512xf32, #tpu.memory_space<vmem>>, vector<1x512xf32>
    %19 = vector.broadcast %18 : vector<1x512xf32> to vector<16x512xf32>
    %20 = arith.mulf %17, %19 : vector<16x512xf32>
    %cst_15 = arith.constant dense<0.000000e+00> : vector<16xf32>
    %21 = vector.multi_reduction <add>, %20, %cst_15 [1] : vector<16x512xf32> to vector<16xf32>
    %22 = vector.shape_cast %21 : vector<16xf32> to vector<16x1xf32>
    %c0_16 = arith.constant 0 : index
    %c0_17 = arith.constant 0 : index
    %23 = vector.load %arg7[%c0_16, %c0_17] : memref<1x1xf32, #tpu.memory_space<vmem>>, vector<1x1xf32>
    %24 = vector.broadcast %23 : vector<1x1xf32> to vector<16x1xf32>
    %25 = arith.addf %22, %24 : vector<16x1xf32>
    %26 = tpu.iota {dimensions = array<i32: 0>} : vector<16x1xi32>
    %27 = tpu.iota {dimensions = array<i32: 0>} : vector<4x128xi32>
    %cst_18 = arith.constant 0.000000e+00 : f32
    %28 = vector.broadcast %cst_18 : f32 to vector<4x128xf32>
    %c0_i32 = arith.constant 0 : i32
    %29 = vector.broadcast %c0_i32 : i32 to vector<16x1xi32>
    %30 = arith.cmpi sge, %26, %29 : vector<16x1xi32>
    %c4_i32 = arith.constant 4 : i32
    %31 = vector.broadcast %c4_i32 : i32 to vector<16x1xi32>
    %32 = arith.cmpi slt, %26, %31 : vector<16x1xi32>
    %33 = arith.andi %30, %32 : vector<16x1xi1>
    %cst_19 = arith.constant -1.000000e+30 : f32
    %34 = vector.broadcast %cst_19 : f32 to vector<16x1xf32>
    %35 = arith.select %33, %25, %34 : vector<16x1xi1>, vector<16x1xf32>
    %36 = vector.shape_cast %35 : vector<16x1xf32> to vector<1x16x1xf32>
    %cst_20 = arith.constant dense<0xFF800000> : vector<1xf32>
    %37 = vector.multi_reduction <maximumf>, %36, %cst_20 [1, 2] : vector<1x16x1xf32> to vector<1xf32>
    %38 = vector.shape_cast %37 : vector<1xf32> to vector<1x1x1xf32>
    %39 = vector.extract %38[0, 0, 0] : f32 from vector<1x1x1xf32>
    %40 = vector.broadcast %39 : f32 to vector<16x1xf32>
    %41 = arith.subf %35, %40 : vector<16x1xf32>
    %42 = math.exp %41 : vector<16x1xf32>
    %cst_21 = arith.constant 0.000000e+00 : f32
    %43 = vector.broadcast %cst_21 : f32 to vector<16x1xf32>
    %44 = arith.select %33, %42, %43 : vector<16x1xi1>, vector<16x1xf32>
    %cst_22 = arith.constant dense<0.000000e+00> : vector<1xf32>
    %45 = vector.multi_reduction <add>, %44, %cst_22 [0] : vector<16x1xf32> to vector<1xf32>
    %46 = vector.shape_cast %45 : vector<1xf32> to vector<1x1xf32>
    %47 = tpu.reciprocal %46 {approx = true} : vector<1x1xf32> -> vector<1x1xf32>
    %48 = vector.broadcast %47 : vector<1x1xf32> to vector<16x1xf32>
    %49 = arith.mulf %44, %48 : vector<16x1xf32>
    %50 = vector.broadcast %49 : vector<16x1xf32> to vector<16x128xf32>
    %51 = arith.mulf %9, %50 : vector<16x128xf32>
    %cst_23 = arith.constant dense<0.000000e+00> : vector<128xf32>
    %52 = vector.multi_reduction <add>, %51, %cst_23 [0] : vector<16x128xf32> to vector<128xf32>
    %53 = vector.shape_cast %52 : vector<128xf32> to vector<1x128xf32>
    %c0_i32_24 = arith.constant 0 : i32
    %54 = vector.broadcast %c0_i32_24 : i32 to vector<4x128xi32>
    %55 = arith.cmpi eq, %27, %54 : vector<4x128xi32>
    %56 = vector.shape_cast %53 : vector<1x128xf32> to vector<1x128xf32>
    %57 = vector.broadcast %56 : vector<1x128xf32> to vector<4x128xf32>
    %58 = arith.select %55, %57, %28 : vector<4x128xi1>, vector<4x128xf32>
    %c4_i32_25 = arith.constant 4 : i32
    %59 = vector.broadcast %c4_i32_25 : i32 to vector<16x1xi32>
    %60 = arith.cmpi sge, %26, %59 : vector<16x1xi32>
    %c8_i32 = arith.constant 8 : i32
    %61 = vector.broadcast %c8_i32 : i32 to vector<16x1xi32>
    %62 = arith.cmpi slt, %26, %61 : vector<16x1xi32>
    %63 = arith.andi %60, %62 : vector<16x1xi1>
    %cst_26 = arith.constant -1.000000e+30 : f32
    %64 = vector.broadcast %cst_26 : f32 to vector<16x1xf32>
    %65 = arith.select %63, %25, %64 : vector<16x1xi1>, vector<16x1xf32>
    %66 = vector.shape_cast %65 : vector<16x1xf32> to vector<1x16x1xf32>
    %cst_27 = arith.constant dense<0xFF800000> : vector<1xf32>
    %67 = vector.multi_reduction <maximumf>, %66, %cst_27 [1, 2] : vector<1x16x1xf32> to vector<1xf32>
    %68 = vector.shape_cast %67 : vector<1xf32> to vector<1x1x1xf32>
    %69 = vector.extract %68[0, 0, 0] : f32 from vector<1x1x1xf32>
    %70 = vector.broadcast %69 : f32 to vector<16x1xf32>
    %71 = arith.subf %65, %70 : vector<16x1xf32>
    %72 = math.exp %71 : vector<16x1xf32>
    %cst_28 = arith.constant 0.000000e+00 : f32
    %73 = vector.broadcast %cst_28 : f32 to vector<16x1xf32>
    %74 = arith.select %63, %72, %73 : vector<16x1xi1>, vector<16x1xf32>
    %cst_29 = arith.constant dense<0.000000e+00> : vector<1xf32>
    %75 = vector.multi_reduction <add>, %74, %cst_29 [0] : vector<16x1xf32> to vector<1xf32>
    %76 = vector.shape_cast %75 : vector<1xf32> to vector<1x1xf32>
    %77 = tpu.reciprocal %76 {approx = true} : vector<1x1xf32> -> vector<1x1xf32>
    %78 = vector.broadcast %77 : vector<1x1xf32> to vector<16x1xf32>
    %79 = arith.mulf %74, %78 : vector<16x1xf32>
    %80 = vector.broadcast %79 : vector<16x1xf32> to vector<16x128xf32>
    %81 = arith.mulf %9, %80 : vector<16x128xf32>
    %cst_30 = arith.constant dense<0.000000e+00> : vector<128xf32>
    %82 = vector.multi_reduction <add>, %81, %cst_30 [0] : vector<16x128xf32> to vector<128xf32>
    %83 = vector.shape_cast %82 : vector<128xf32> to vector<1x128xf32>
    %c1_i32 = arith.constant 1 : i32
    %84 = vector.broadcast %c1_i32 : i32 to vector<4x128xi32>
    %85 = arith.cmpi eq, %27, %84 : vector<4x128xi32>
    %86 = vector.shape_cast %83 : vector<1x128xf32> to vector<1x128xf32>
    %87 = vector.broadcast %86 : vector<1x128xf32> to vector<4x128xf32>
    %88 = arith.select %85, %87, %58 : vector<4x128xi1>, vector<4x128xf32>
    %c8_i32_31 = arith.constant 8 : i32
    %89 = vector.broadcast %c8_i32_31 : i32 to vector<16x1xi32>
    %90 = arith.cmpi sge, %26, %89 : vector<16x1xi32>
    %c12_i32 = arith.constant 12 : i32
    %91 = vector.broadcast %c12_i32 : i32 to vector<16x1xi32>
    %92 = arith.cmpi slt, %26, %91 : vector<16x1xi32>
    %93 = arith.andi %90, %92 : vector<16x1xi1>
    %cst_32 = arith.constant -1.000000e+30 : f32
    %94 = vector.broadcast %cst_32 : f32 to vector<16x1xf32>
    %95 = arith.select %93, %25, %94 : vector<16x1xi1>, vector<16x1xf32>
    %96 = vector.shape_cast %95 : vector<16x1xf32> to vector<1x16x1xf32>
    %cst_33 = arith.constant dense<0xFF800000> : vector<1xf32>
    %97 = vector.multi_reduction <maximumf>, %96, %cst_33 [1, 2] : vector<1x16x1xf32> to vector<1xf32>
    %98 = vector.shape_cast %97 : vector<1xf32> to vector<1x1x1xf32>
    %99 = vector.extract %98[0, 0, 0] : f32 from vector<1x1x1xf32>
    %100 = vector.broadcast %99 : f32 to vector<16x1xf32>
    %101 = arith.subf %95, %100 : vector<16x1xf32>
    %102 = math.exp %101 : vector<16x1xf32>
    %cst_34 = arith.constant 0.000000e+00 : f32
    %103 = vector.broadcast %cst_34 : f32 to vector<16x1xf32>
    %104 = arith.select %93, %102, %103 : vector<16x1xi1>, vector<16x1xf32>
    %cst_35 = arith.constant dense<0.000000e+00> : vector<1xf32>
    %105 = vector.multi_reduction <add>, %104, %cst_35 [0] : vector<16x1xf32> to vector<1xf32>
    %106 = vector.shape_cast %105 : vector<1xf32> to vector<1x1xf32>
    %107 = tpu.reciprocal %106 {approx = true} : vector<1x1xf32> -> vector<1x1xf32>
    %108 = vector.broadcast %107 : vector<1x1xf32> to vector<16x1xf32>
    %109 = arith.mulf %104, %108 : vector<16x1xf32>
    %110 = vector.broadcast %109 : vector<16x1xf32> to vector<16x128xf32>
    %111 = arith.mulf %9, %110 : vector<16x128xf32>
    %cst_36 = arith.constant dense<0.000000e+00> : vector<128xf32>
    %112 = vector.multi_reduction <add>, %111, %cst_36 [0] : vector<16x128xf32> to vector<128xf32>
    %113 = vector.shape_cast %112 : vector<128xf32> to vector<1x128xf32>
    %c2_i32 = arith.constant 2 : i32
    %114 = vector.broadcast %c2_i32 : i32 to vector<4x128xi32>
    %115 = arith.cmpi eq, %27, %114 : vector<4x128xi32>
    %116 = vector.shape_cast %113 : vector<1x128xf32> to vector<1x128xf32>
    %117 = vector.broadcast %116 : vector<1x128xf32> to vector<4x128xf32>
    %118 = arith.select %115, %117, %88 : vector<4x128xi1>, vector<4x128xf32>
    %c12_i32_37 = arith.constant 12 : i32
    %119 = vector.broadcast %c12_i32_37 : i32 to vector<16x1xi32>
    %120 = arith.cmpi sge, %26, %119 : vector<16x1xi32>
    %c16_i32 = arith.constant 16 : i32
    %121 = vector.broadcast %c16_i32 : i32 to vector<16x1xi32>
    %122 = arith.cmpi slt, %26, %121 : vector<16x1xi32>
    %123 = arith.andi %120, %122 : vector<16x1xi1>
    %cst_38 = arith.constant -1.000000e+30 : f32
    %124 = vector.broadcast %cst_38 : f32 to vector<16x1xf32>
    %125 = arith.select %123, %25, %124 : vector<16x1xi1>, vector<16x1xf32>
    %126 = vector.shape_cast %125 : vector<16x1xf32> to vector<1x16x1xf32>
    %cst_39 = arith.constant dense<0xFF800000> : vector<1xf32>
    %127 = vector.multi_reduction <maximumf>, %126, %cst_39 [1, 2] : vector<1x16x1xf32> to vector<1xf32>
    %128 = vector.shape_cast %127 : vector<1xf32> to vector<1x1x1xf32>
    %129 = vector.extract %128[0, 0, 0] : f32 from vector<1x1x1xf32>
    %130 = vector.broadcast %129 : f32 to vector<16x1xf32>
    %131 = arith.subf %125, %130 : vector<16x1xf32>
    %132 = math.exp %131 : vector<16x1xf32>
    %cst_40 = arith.constant 0.000000e+00 : f32
    %133 = vector.broadcast %cst_40 : f32 to vector<16x1xf32>
    %134 = arith.select %123, %132, %133 : vector<16x1xi1>, vector<16x1xf32>
    %cst_41 = arith.constant dense<0.000000e+00> : vector<1xf32>
    %135 = vector.multi_reduction <add>, %134, %cst_41 [0] : vector<16x1xf32> to vector<1xf32>
    %136 = vector.shape_cast %135 : vector<1xf32> to vector<1x1xf32>
    %137 = tpu.reciprocal %136 {approx = true} : vector<1x1xf32> -> vector<1x1xf32>
    %138 = vector.broadcast %137 : vector<1x1xf32> to vector<16x1xf32>
    %139 = arith.mulf %134, %138 : vector<16x1xf32>
    %140 = vector.broadcast %139 : vector<16x1xf32> to vector<16x128xf32>
    %141 = arith.mulf %9, %140 : vector<16x128xf32>
    %cst_42 = arith.constant dense<0.000000e+00> : vector<128xf32>
    %142 = vector.multi_reduction <add>, %141, %cst_42 [0] : vector<16x128xf32> to vector<128xf32>
    %143 = vector.shape_cast %142 : vector<128xf32> to vector<1x128xf32>
    %c3_i32 = arith.constant 3 : i32
    %144 = vector.broadcast %c3_i32 : i32 to vector<4x128xi32>
    %145 = arith.cmpi eq, %27, %144 : vector<4x128xi32>
    %146 = vector.shape_cast %143 : vector<1x128xf32> to vector<1x128xf32>
    %147 = vector.broadcast %146 : vector<1x128xf32> to vector<4x128xf32>
    %148 = arith.select %145, %147, %118 : vector<4x128xi1>, vector<4x128xf32>
    %149 = arith.truncf %148 : vector<4x128xf32> to vector<4x128xbf16>
    %c0_43 = arith.constant 0 : index
    %c0_44 = arith.constant 0 : index
    %150 = vector.load %arg8[%c0_43, %c0_44] : memref<128x128xbf16, #tpu.memory_space<vmem>>, vector<128x128xbf16>
    %cst_45 = arith.constant dense<0.000000e+00> : vector<4x128xf32>
    %151 = tpu.matmul %149, %150, %cst_45 {dimension_numbers = #tpu.dot_dimension_numbers<[1], [0], [0], [1], [0, 0, 1, 1], [], []>} : vector<4x128xbf16>, vector<128x128xbf16>, vector<4x128xf32> -> vector<4x128xf32>
    %c0_46 = arith.constant 0 : index
    %c0_47 = arith.constant 0 : index
    %152 = vector.load %arg9[%c0_46, %c0_47] : memref<1x128xf32, #tpu.memory_space<vmem>>, vector<1x128xf32>
    %153 = vector.broadcast %152 : vector<1x128xf32> to vector<4x128xf32>
    %154 = arith.addf %151, %153 : vector<4x128xf32>
    %155 = arith.negf %154 : vector<4x128xf32>
    %156 = math.exp %155 : vector<4x128xf32>
    %cst_48 = arith.constant 1.000000e+00 : f32
    %157 = vector.broadcast %cst_48 : f32 to vector<4x128xf32>
    %158 = arith.addf %157, %156 : vector<4x128xf32>
    %159 = arith.divf %157, %158 : vector<4x128xf32>
    %c0_49 = arith.constant 0 : index
    %c0_50 = arith.constant 0 : index
    %160 = vector.load %arg10[%c0_49, %c0_50] : memref<4x128xf32, #tpu.memory_space<vmem>>, vector<4x128xf32>
    tpu.vector_store %arg10[%c0_49, %c0_50], %159 {strides = array<i32>} : memref<4x128xf32, #tpu.memory_space<vmem>>, vector<4x128xf32>,
    %161 = vector.extract_strided_slice %154 {offsets = [0, 0], sizes = [4, 8], strides = [1, 1]} : vector<4x128xf32> to vector<4x8xf32>
    %c0_51 = arith.constant 0 : index
    %c0_52 = arith.constant 0 : index
    %162 = vector.load %arg1[%c0_51, %c0_52] : memref<4x8xf32, #tpu.memory_space<vmem>>, vector<4x8xf32>
    %cst_53 = arith.constant 0.000000e+00 : f32
    %163 = vector.broadcast %cst_53 : f32 to vector<4x8xf32>
    %164 = arith.maximumf %161, %163 : vector<4x8xf32>
    %165 = arith.mulf %161, %162 : vector<4x8xf32>
    %166 = arith.subf %164, %165 : vector<4x8xf32>
    %167 = math.absf %161 : vector<4x8xf32>
    %cst_54 = arith.constant 0.000000e+00 : f32
    %168 = vector.broadcast %cst_54 : f32 to vector<4x8xf32>
    %169 = arith.subf %168, %167 : vector<4x8xf32>
    %170 = math.exp %169 : vector<4x8xf32>
    %171 = math.log1p %170 : vector<4x8xf32>
    %172 = arith.addf %166, %171 : vector<4x8xf32>
    %173 = vector.shape_cast %172 : vector<4x8xf32> to vector<1x4x8xf32>
    %cst_55 = arith.constant dense<0.000000e+00> : vector<1xf32>
    %174 = vector.multi_reduction <add>, %173, %cst_55 [1, 2] : vector<1x4x8xf32> to vector<1xf32>
    %175 = vector.shape_cast %174 : vector<1xf32> to vector<1x1x1xf32>
    %176 = vector.extract %175[0, 0, 0] : f32 from vector<1x1x1xf32>
    %cst_56 = arith.constant 3.125000e-02 : f32
    %177 = arith.mulf %176, %cst_56 : f32
    %c0_57 = arith.constant 0 : index
    %c0_58 = arith.constant 0 : index
    %178 = memref.load %arg11[%c0_57, %c0_58] : memref<1x1xf32, #tpu.memory_space<smem>>
    memref.store %177, %arg11[%c0_57, %c0_58] : memref<1x1xf32, #tpu.memory_space<smem>>
    return
  }
}

</mosaic_0001>

<llo_original>
// kernel: net_forward.1
$region0: #{net_forward.1}
  #allocation0 [shape = 'u32[]', space=smem, size = 0x4, offset = 0x4, fixed_abs, tag = 'smem constant byte address 0x4 - core index']
  #allocation1 [shape = 'u32[144,128]{1,0:T(1,128)}', space=vmem, size = 0x12000, scoped, tag = 'internal scratch']
  #allocation2 [shape = 'f32[1,1]{1,0:T(1,128)S(1)}', space=vmem, size = 0x200, scoped, tag = 'scoped memory for net_forward.1']
  %s0 = inlined_call_operand.vmem [shape: bf16[256,16], index: 0, kind: input, shape index: {}]
  %s1 = inlined_call_operand.vmem [shape: f32[4,8], index: 1, kind: input, shape index: {}]
  %s2 = inlined_call_operand.vmem [shape: bf16[16,128], index: 2, kind: input, shape index: {}]
  %s3 = inlined_call_operand.vmem [shape: f32[1,128], index: 3, kind: input, shape index: {}]
  %s4 = inlined_call_operand.vmem [shape: bf16[128,512], index: 4, kind: input, shape index: {}]
  %s5 = inlined_call_operand.vmem [shape: f32[1,512], index: 5, kind: input, shape index: {}]
  %s6 = inlined_call_operand.vmem [shape: f32[1,512], index: 6, kind: input, shape index: {}]
  %s7 = inlined_call_operand.<no memory space> [shape: f32[1,1], index: 7, kind: input, shape index: {}]
  %s8 = inlined_call_operand.vmem [shape: bf16[128,128], index: 8, kind: input, shape index: {}]
  %s9 = inlined_call_operand.vmem [shape: f32[1,128], index: 9, kind: input, shape index: {}]
  %s10 = inlined_call_operand.hbm [shape: f32[4,128], index: 10, kind: output, shape index: {0}]
  %s11 = inlined_call_operand.hbm [shape: f32[1,1], index: 11, kind: output, shape index: {1}]
  %12 = xla_tuple %s10, %s11
  %s13 = sld [smem:[#allocation0]]
  $region58: #{net_forward.1} parent=0
    _
  %s15 = ssub.s32 1, %s13
  %s16 = scalar_select 0, %s15, %s13
  %v17 = vstv %s7
  %18 = vst [vmem:[#allocation2] sm:$0x1] %v17
  $region1: #{net_forward.1} parent=0
    #allocation3 [shape = 'u8[2048]{0}', space=vmem, size = 0x800, scoped, tag = 'output window, operand 0, single buffered']
    #allocation4 [shape = 's32[1]{0}', space=sflag, size = 0x4, scoped, tag = 'scoped memory for net_forward.1']
    #allocation5 [shape = 's32[1]{0}', space=sflag, size = 0x4, scoped, tag = 'scoped memory for net_forward.1']
    #allocation6 [shape = 'u8[512]{0}', space=smem, size = 0x200, scoped, tag = 'output window, operand 1, single buffered']
    %19 = vsyncpa [#allocation4], 0
    %20 = vsyncpa [#allocation5], 0
    // Predicated region
    $region2: #{net_forward.1} parent=1 // pred_check
      _
    $region3: #{net_forward.1} parent=1 // pred_check_branch
      %22 = sbr.rel (0) target = $region5
    $region4: #{net_forward.1} parent=1 // pred_region
      _
    $region5: #{net_forward.1} parent=1 // pred_fallthru
      _
    // Predicated region
    $region6: #{net_forward.1} parent=1 // pred_check
      _
    $region7: #{net_forward.1} parent=1 // pred_check_branch
      %24 = sbr.rel (0) target = $region9
    $region8: #{net_forward.1} parent=1 // pred_region
      _
    $region9: #{net_forward.1} parent=1 // pred_fallthru
      _
    // Predicated region
    $region10: #{net_forward.1} parent=1 // pred_check
      _
    $region11: #{net_forward.1} parent=1 // pred_check_branch
      %26 = sbr.rel (0) target = $region13
    $region12: #{net_forward.1} parent=1 // pred_region
      _
    $region13: #{net_forward.1} parent=1 // pred_fallthru
      _
    // Predicated region
    $region14: #{net_forward.1} parent=1 // pred_check
      _
    $region15: #{net_forward.1} parent=1 // pred_check_branch
      %28 = sbr.rel (0) target = $region17
    $region16: #{net_forward.1} parent=1 // pred_region
      _
    $region17: #{net_forward.1} parent=1 // pred_fallthru
      _
    // Predicated region
    $region18: #{net_forward.1} parent=1 // pred_check
      _
    $region19: #{net_forward.1} parent=1 // pred_check_branch
      %30 = sbr.rel (0) target = $region21
    $region20: #{net_forward.1} parent=1 // pred_region
      _
    $region21: #{net_forward.1} parent=1 // pred_fallthru
      _
    // Predicated region
    $region22: #{net_forward.1} parent=1 // pred_check
      _
    $region23: #{net_forward.1} parent=1 // pred_check_branch
      %32 = sbr.rel (0) target = $region25
    $region24: #{net_forward.1} parent=1 // pred_region
      _
    $region25: #{net_forward.1} parent=1 // pred_fallthru
      _
    // Predicated region
    $region26: #{net_forward.1} parent=1 // pred_check
      _
    $region27: #{net_forward.1} parent=1 // pred_check_branch
      %34 = sbr.rel (0) target = $region29
    $region28: #{net_forward.1} parent=1 // pred_region
      _
    $region29: #{net_forward.1} parent=1 // pred_fallthru
      _
    // Predicated region
    $region30: #{net_forward.1} parent=1 // pred_check
      _
    $region31: #{net_forward.1} parent=1 // pred_check_branch
      %36 = sbr.rel (0) target = $region33
    $region32: #{net_forward.1} parent=1 // pred_region
      _
    $region33: #{net_forward.1} parent=1 // pred_fallthru
      _
    // Predicated region
    $region34: #{net_forward.1} parent=1 // pred_check
      _
    $region35: #{net_forward.1} parent=1 // pred_check_branch
      %38 = sbr.rel (0) target = $region37
    $region36: #{net_forward.1} parent=1 // pred_region
      _
    $region37: #{net_forward.1} parent=1 // pred_fallthru
      _
    // Predicated region
    $region38: #{net_forward.1} parent=1 // pred_check
      _
    $region39: #{net_forward.1} parent=1 // pred_check_branch
      %40 = sbr.rel (0) target = $region41
    $region40: #{net_forward.1} parent=1 // pred_region
      _
    $region41: #{net_forward.1} parent=1 // pred_fallthru
      _
    %v42 = vld [vmem:[%s0] sm:$0xf]
    %v43 = vld [vmem:[%s0 + $0x4] sm:$0xf]
    %v44 = vld [vmem:[%s0 + $0x8] sm:$0xf]
    %v45 = vld [vmem:[%s0 + $0xc] sm:$0xf]
    %v46 = vld [vmem:[%s0 + $0x10] sm:$0xf]
    %v47 = vld [vmem:[%s0 + $0x14] sm:$0xf]
    %v48 = vld [vmem:[%s0 + $0x18] sm:$0xf]
    %v49 = vld [vmem:[%s0 + $0x1c] sm:$0xf]
    %v50 = vld [vmem:[%s0 + $0x20] sm:$0xf]
    %v51 = vld [vmem:[%s0 + $0x24] sm:$0xf]
    %v52 = vld [vmem:[%s0 + $0x28] sm:$0xf]
    %v53 = vld [vmem:[%s0 + $0x2c] sm:$0xf]
    %v54 = vld [vmem:[%s0 + $0x30] sm:$0xf]
    %v55 = vld [vmem:[%s0 + $0x34] sm:$0xf]
    %v56 = vld [vmem:[%s0 + $0x38] sm:$0xf]
    %v57 = vld [vmem:[%s0 + $0x3c] sm:$0xf]
    %v58 = vld [vmem:[%s0 + $0x40] sm:$0xf]
    %v59 = vld [vmem:[%s0 + $0x44] sm:$0xf]
    %v60 = vld [vmem:[%s0 + $0x48] sm:$0xf]
    %v61 = vld [vmem:[%s0 + $0x4c] sm:$0xf]
    %v62 = vld [vmem:[%s0 + $0x50] sm:$0xf]
    %v63 = vld [vmem:[%s0 + $0x54] sm:$0xf]
    %v64 = vld [vmem:[%s0 + $0x58] sm:$0xf]
    %v65 = vld [vmem:[%s0 + $0x5c] sm:$0xf]
    %v66 = vld [vmem:[%s0 + $0x60] sm:$0xf]
    %v67 = vld [vmem:[%s0 + $0x64] sm:$0xf]
    %v68 = vld [vmem:[%s0 + $0x68] sm:$0xf]
    %v69 = vld [vmem:[%s0 + $0x6c] sm:$0xf]
    %v70 = vld [vmem:[%s0 + $0x70] sm:$0xf]
    %v71 = vld [vmem:[%s0 + $0x74] sm:$0xf]
    %v72 = vld [vmem:[%s0 + $0x78] sm:$0xf]
    %v73 = vld [vmem:[%s0 + $0x7c] sm:$0xf]
    %v74 = vld [vmem:[%s2] sm:$0xf]
    %v75 = vld [vmem:[%s2 + $0x4] sm:$0xf]
    %v76 = vld [vmem:[%s3] sm:$0x1]
    %v78 = vlaneseq
    %v79 = vshrl.u32 %v78, 7
    %v80 = vsub.s32 0, %v79
    %v81 = vrot.slane %v76, %v80
    %v115 = vunpack.c.l.b16 %v42
    %v116 = vunpack.c.l.b16 %v43
    %v117 = vunpack.c.l.b16 %v44
    %v118 = vunpack.c.l.b16 %v45
    %v119 = vunpack.c.l.b16 %v46
    %v120 = vunpack.c.l.b16 %v47
    %v121 = vunpack.c.l.b16 %v48
    %v122 = vunpack.c.l.b16 %v49
    %v123 = vunpack.c.l.b16 %v50
    %v124 = vunpack.c.l.b16 %v51
    %v125 = vunpack.c.l.b16 %v52
    %v126 = vunpack.c.l.b16 %v53
    %v127 = vunpack.c.l.b16 %v54
    %v128 = vunpack.c.l.b16 %v55
    %v129 = vunpack.c.l.b16 %v56
    %v130 = vunpack.c.l.b16 %v57
    %v131 = vunpack.c.l.b16 %v58
    %v132 = vunpack.c.l.b16 %v59
    %v133 = vunpack.c.l.b16 %v60
    %v134 = vunpack.c.l.b16 %v61
    %v135 = vunpack.c.l.b16 %v62
    %v136 = vunpack.c.l.b16 %v63
    %v137 = vunpack.c.l.b16 %v64
    %v138 = vunpack.c.l.b16 %v65
    %v139 = vunpack.c.l.b16 %v66
    %v140 = vunpack.c.l.b16 %v67
    %v141 = vunpack.c.l.b16 %v68
    %v142 = vunpack.c.l.b16 %v69
    %v143 = vunpack.c.l.b16 %v70
    %v144 = vunpack.c.l.b16 %v71
    %v145 = vunpack.c.l.b16 %v72
    %v146 = vunpack.c.l.b16 %v73
    %v147 = vpack.c.b16 %v116, %v115
    %v148 = vpack.c.b16 %v118, %v117
    %v149 = vpack.c.b16 %v120, %v119
    %v150 = vpack.c.b16 %v122, %v121
    %v151 = vpack.c.b16 %v124, %v123
    %v152 = vpack.c.b16 %v126, %v125
    %v153 = vpack.c.b16 %v128, %v127
    %v154 = vpack.c.b16 %v130, %v129
    %v155 = vpack.c.b16 %v132, %v131
    %v156 = vpack.c.b16 %v134, %v133
    %v157 = vpack.c.b16 %v136, %v135
    %v158 = vpack.c.b16 %v138, %v137
    %v159 = vpack.c.b16 %v140, %v139
    %v160 = vpack.c.b16 %v142, %v141
    %v161 = vpack.c.b16 %v144, %v143
    %v162 = vpack.c.b16 %v146, %v145
    %v165 = vunpack.c.l.b16 %v74
    %v166 = vunpack.c.l.b16 %v75
    %v167 = vpack.c.b16 %v166, %v165
    %vm169 = vcmask 130048
    %v171 = vsel %vm169, %v147, 0
    %v174 = vsel %vm169, %v148, 0
    %v177 = vsel %vm169, %v149, 0
    %v180 = vsel %vm169, %v150, 0
    %v183 = vsel %vm169, %v151, 0
    %v186 = vsel %vm169, %v152, 0
    %v189 = vsel %vm169, %v153, 0
    %v192 = vsel %vm169, %v154, 0
    %v195 = vsel %vm169, %v155, 0
    %v198 = vsel %vm169, %v156, 0
    %v201 = vsel %vm169, %v157, 0
    %v204 = vsel %vm169, %v158, 0
    %v207 = vsel %vm169, %v159, 0
    %v210 = vsel %vm169, %v160, 0
    %v213 = vsel %vm169, %v161, 0
    %v216 = vsel %vm169, %v162, 0
    %218 = vmatprep.subr.bf16.mxu0 0
    %219 = vmatpush1.bf16.msra.mxu0 0
    %220 = vmatprep.subr.bf16.mxu0 0
    %221 = vmatpush1.bf16.msra.mxu0 0
    %222 = vmatprep.subr.bf16.mxu0 0
    %223 = vmatpush1.bf16.msra.mxu0 0
    %224 = vmatprep.subr.bf16.mxu0 0
    %225 = vmatpush1.bf16.msra.mxu0 0
    %226 = vmatprep.subr.bf16.mxu0 0
    %227 = vmatpush1.bf16.msra.mxu0 0
    %228 = vmatprep.subr.bf16.mxu0 0
    %229 = vmatpush1.bf16.msra.mxu0 0
    %230 = vmatprep.subr.bf16.mxu0 0
    %231 = vmatpush1.bf16.msra.mxu0 0
    %232 = vmatprep.subr.bf16.mxu0 0
    %233 = vmatpush1.bf16.msra.mxu0 %v167
    %234 = vmatprep.subr.bf16.mxu0 0
    %235 = vmatpush2.bf16.msra.mxu0 0
    %236 = vmatprep.subr.bf16.mxu0 0
    %237 = vmatpush2.bf16.msra.mxu0 0
    %238 = vmatprep.subr.bf16.mxu0 0
    %239 = vmatpush2.bf16.msra.mxu0 0
    %240 = vmatprep.subr.bf16.mxu0 0
    %241 = vmatpush2.bf16.msra.mxu0 0
    %242 = vmatprep.subr.bf16.mxu0 0
    %243 = vmatpush2.bf16.msra.mxu0 0
    %244 = vmatprep.subr.bf16.mxu0 0
    %245 = vmatpush2.bf16.msra.mxu0 0
    %246 = vmatprep.subr.bf16.mxu0 0
    %247 = vmatpush2.bf16.msra.mxu0 0
    %248 = vmatprep.subr.bf16.mxu0 0
    %249 = vmatpush2.bf16.msra.mxu0 0
    %250 = vmatprep.mubr.bf16.mxu0 0
    %251 = vmatmul.mubr.bf16.gmra.mxu0 %v171
    %v252 = vpop.f32.mrf.mxu0
    %v253 = vadd.f32 %v81, %v252
    %v254 = vpop.f32.mrf.mxu0
    %v255 = vpop.f32.mrf.mxu0
    %v256 = vadd.f32 %v81, %v255
    %v257 = vpop.f32.mrf.mxu0
    %258 = vmatprep.mubr.bf16.mxu0 0
    %259 = vmatmul.mubr.bf16.gmra.mxu0 %v174
    %v260 = vpop.f32.mrf.mxu0
    %v261 = vadd.f32 %v81, %v260
    %v262 = vpop.f32.mrf.mxu0
    %v263 = vpop.f32.mrf.mxu0
    %v264 = vadd.f32 %v81, %v263
    %v265 = vpop.f32.mrf.mxu0
    %266 = vmatprep.mubr.bf16.mxu0 0
    %267 = vmatmul.mubr.bf16.gmra.mxu0 %v177
    %v268 = vpop.f32.mrf.mxu0
    %v269 = vadd.f32 %v81, %v268
    %v270 = vpop.f32.mrf.mxu0
    %v271 = vpop.f32.mrf.mxu0
    %v272 = vadd.f32 %v81, %v271
    %v273 = vpop.f32.mrf.mxu0
    %274 = vmatprep.mubr.bf16.mxu0 0
    %275 = vmatmul.mubr.bf16.gmra.mxu0 %v180
    %v276 = vpop.f32.mrf.mxu0
    %v277 = vadd.f32 %v81, %v276
    %v278 = vpop.f32.mrf.mxu0
    %v279 = vpop.f32.mrf.mxu0
    %v280 = vadd.f32 %v81, %v279
    %v281 = vpop.f32.mrf.mxu0
    %282 = vmatprep.mubr.bf16.mxu0 0
    %283 = vmatmul.mubr.bf16.gmra.mxu0 %v183
    %v284 = vpop.f32.mrf.mxu0
    %v285 = vadd.f32 %v81, %v284
    %v286 = vpop.f32.mrf.mxu0
    %v287 = vpop.f32.mrf.mxu0
    %v288 = vadd.f32 %v81, %v287
    %v289 = vpop.f32.mrf.mxu0
    %290 = vmatprep.mubr.bf16.mxu0 0
    %291 = vmatmul.mubr.bf16.gmra.mxu0 %v186
    %v292 = vpop.f32.mrf.mxu0
    %v293 = vadd.f32 %v81, %v292
    %v294 = vpop.f32.mrf.mxu0
    %v295 = vpop.f32.mrf.mxu0
    %v296 = vadd.f32 %v81, %v295
    %v297 = vpop.f32.mrf.mxu0
    %298 = vmatprep.mubr.bf16.mxu0 0
    %299 = vmatmul.mubr.bf16.gmra.mxu0 %v189
    %v300 = vpop.f32.mrf.mxu0
    %v301 = vadd.f32 %v81, %v300
    %v302 = vpop.f32.mrf.mxu0
    %v303 = vpop.f32.mrf.mxu0
    %v304 = vadd.f32 %v81, %v303
    %v305 = vpop.f32.mrf.mxu0
    %306 = vmatprep.mubr.bf16.mxu0 0
    %307 = vmatmul.mubr.bf16.gmra.mxu0 %v192
    %v308 = vpop.f32.mrf.mxu0
    %v309 = vadd.f32 %v81, %v308
    %v310 = vpop.f32.mrf.mxu0
    %v311 = vpop.f32.mrf.mxu0
    %v312 = vadd.f32 %v81, %v311
    %v313 = vpop.f32.mrf.mxu0
    %314 = vmatprep.mubr.bf16.mxu0 0
    %315 = vmatmul.mubr.bf16.gmra.mxu0 %v195
    %v316 = vpop.f32.mrf.mxu0
    %v317 = vadd.f32 %v81, %v316
    %v318 = vpop.f32.mrf.mxu0
    %v319 = vpop.f32.mrf.mxu0
    %v320 = vadd.f32 %v81, %v319
    %v321 = vpop.f32.mrf.mxu0
    %322 = vmatprep.mubr.bf16.mxu0 0
    %323 = vmatmul.mubr.bf16.gmra.mxu0 %v198
    %v324 = vpop.f32.mrf.mxu0
    %v325 = vadd.f32 %v81, %v324
    %v326 = vpop.f32.mrf.mxu0
    %v327 = vpop.f32.mrf.mxu0
    %v328 = vadd.f32 %v81, %v327
    %v329 = vpop.f32.mrf.mxu0
    %330 = vmatprep.mubr.bf16.mxu0 0
    %331 = vmatmul.mubr.bf16.gmra.mxu0 %v201
    %v332 = vpop.f32.mrf.mxu0
    %v333 = vadd.f32 %v81, %v332
    %v334 = vpop.f32.mrf.mxu0
    %v335 = vpop.f32.mrf.mxu0
    %v336 = vadd.f32 %v81, %v335
    %v337 = vpop.f32.mrf.mxu0
    %338 = vmatprep.mubr.bf16.mxu0 0
    %339 = vmatmul.mubr.bf16.gmra.mxu0 %v204
    %v340 = vpop.f32.mrf.mxu0
    %v341 = vadd.f32 %v81, %v340
    %v342 = vpop.f32.mrf.mxu0
    %v343 = vpop.f32.mrf.mxu0
    %v344 = vadd.f32 %v81, %v343
    %v345 = vpop.f32.mrf.mxu0
    %346 = vmatprep.mubr.bf16.mxu0 0
    %347 = vmatmul.mubr.bf16.gmra.mxu0 %v207
    %v348 = vpop.f32.mrf.mxu0
    %v349 = vadd.f32 %v81, %v348
    %v350 = vpop.f32.mrf.mxu0
    %v351 = vpop.f32.mrf.mxu0
    %v352 = vadd.f32 %v81, %v351
    %v353 = vpop.f32.mrf.mxu0
    %354 = vmatprep.mubr.bf16.mxu0 0
    %355 = vmatmul.mubr.bf16.gmra.mxu0 %v210
    %v356 = vpop.f32.mrf.mxu0
    %v357 = vadd.f32 %v81, %v356
    %v358 = vpop.f32.mrf.mxu0
    %v359 = vpop.f32.mrf.mxu0
    %v360 = vadd.f32 %v81, %v359
    %v361 = vpop.f32.mrf.mxu0
    %362 = vmatprep.mubr.bf16.mxu0 0
    %363 = vmatmul.mubr.bf16.gmra.mxu0 %v213
    %v364 = vpop.f32.mrf.mxu0
    %v365 = vadd.f32 %v81, %v364
    %v366 = vpop.f32.mrf.mxu0
    %v367 = vpop.f32.mrf.mxu0
    %v368 = vadd.f32 %v81, %v367
    %v369 = vpop.f32.mrf.mxu0
    %370 = vmatprep.mubr.bf16.mxu0 0
    %371 = vmatmul.mubr.bf16.gmra.mxu0 %v216
    %v372 = vpop.f32.mrf.mxu0
    %v373 = vadd.f32 %v81, %v372
    %v374 = vpop.f32.mrf.mxu0
    %v375 = vpop.f32.mrf.mxu0
    %v376 = vadd.f32 %v81, %v375
    %v377 = vpop.f32.mrf.mxu0
    %378 = vdwg.mxu0
    %v379 = vadd.f32 %v253, %v256
    %v380 = vrot.slane %v379, 4
    %v381 = vadd.f32 %v379, %v380
    %v382 = vrot.slane %v381, 2
    %v383 = vadd.f32 %v381, %v382
    %v384 = vrot.slane %v383, 1
    %v385 = vadd.f32 %v383, %v384
    %v386 = vadd.f32 %v261, %v264
    %v387 = vrot.slane %v386, 4
    %v388 = vadd.f32 %v386, %v387
    %v389 = vrot.slane %v388, 2
    %v390 = vadd.f32 %v388, %v389
    %v391 = vrot.slane %v390, 1
    %v392 = vadd.f32 %v390, %v391
    %v393 = vadd.f32 %v269, %v272
    %v394 = vrot.slane %v393, 4
    %v395 = vadd.f32 %v393, %v394
    %v396 = vrot.slane %v395, 2
    %v397 = vadd.f32 %v395, %v396
    %v398 = vrot.slane %v397, 1
    %v399 = vadd.f32 %v397, %v398
    %v400 = vadd.f32 %v277, %v280
    %v401 = vrot.slane %v400, 4
    %v402 = vadd.f32 %v400, %v401
    %v403 = vrot.slane %v402, 2
    %v404 = vadd.f32 %v402, %v403
    %v405 = vrot.slane %v404, 1
    %v406 = vadd.f32 %v404, %v405
    %v407 = vadd.f32 %v285, %v288
    %v408 = vrot.slane %v407, 4
    %v409 = vadd.f32 %v407, %v408
    %v410 = vrot.slane %v409, 2
    %v411 = vadd.f32 %v409, %v410
    %v412 = vrot.slane %v411, 1
    %v413 = vadd.f32 %v411, %v412
    %v414 = vadd.f32 %v293, %v296
    %v415 = vrot.slane %v414, 4
    %v416 = vadd.f32 %v414, %v415
    %v417 = vrot.slane %v416, 2
    %v418 = vadd.f32 %v416, %v417
    %v419 = vrot.slane %v418, 1
    %v420 = vadd.f32 %v418, %v419
    %v421 = vadd.f32 %v301, %v304
    %v422 = vrot.slane %v421, 4
    %v423 = vadd.f32 %v421, %v422
    %v424 = vrot.slane %v423, 2
    %v425 = vadd.f32 %v423, %v424
    %v426 = vrot.slane %v425, 1
    %v427 = vadd.f32 %v425, %v426
    %v428 = vadd.f32 %v309, %v312
    %v429 = vrot.slane %v428, 4
    %v430 = vadd.f32 %v428, %v429
    %v431 = vrot.slane %v430, 2
    %v432 = vadd.f32 %v430, %v431
    %v433 = vrot.slane %v432, 1
    %v434 = vadd.f32 %v432, %v433
    %v435 = vadd.f32 %v317, %v320
    %v436 = vrot.slane %v435, 4
    %v437 = vadd.f32 %v435, %v436
    %v438 = vrot.slane %v437, 2
    %v439 = vadd.f32 %v437, %v438
    %v440 = vrot.slane %v439, 1
    %v441 = vadd.f32 %v439, %v440
    %v442 = vadd.f32 %v325, %v328
    %v443 = vrot.slane %v442, 4
    %v444 = vadd.f32 %v442, %v443
    %v445 = vrot.slane %v444, 2
    %v446 = vadd.f32 %v444, %v445
    %v447 = vrot.slane %v446, 1
    %v448 = vadd.f32 %v446, %v447
    %v449 = vadd.f32 %v333, %v336
    %v450 = vrot.slane %v449, 4
    %v451 = vadd.f32 %v449, %v450
    %v452 = vrot.slane %v451, 2
    %v453 = vadd.f32 %v451, %v452
    %v454 = vrot.slane %v453, 1
    %v455 = vadd.f32 %v453, %v454
    %v456 = vadd.f32 %v341, %v344
    %v457 = vrot.slane %v456, 4
    %v458 = vadd.f32 %v456, %v457
    %v459 = vrot.slane %v458, 2
    %v460 = vadd.f32 %v458, %v459
    %v461 = vrot.slane %v460, 1
    %v462 = vadd.f32 %v460, %v461
    %v463 = vadd.f32 %v349, %v352
    %v464 = vrot.slane %v463, 4
    %v465 = vadd.f32 %v463, %v464
    %v466 = vrot.slane %v465, 2
    %v467 = vadd.f32 %v465, %v466
    %v468 = vrot.slane %v467, 1
    %v469 = vadd.f32 %v467, %v468
    %v470 = vadd.f32 %v357, %v360
    %v471 = vrot.slane %v470, 4
    %v472 = vadd.f32 %v470, %v471
    %v473 = vrot.slane %v472, 2
    %v474 = vadd.f32 %v472, %v473
    %v475 = vrot.slane %v474, 1
    %v476 = vadd.f32 %v474, %v475
    %v477 = vadd.f32 %v365, %v368
    %v478 = vrot.slane %v477, 4
    %v479 = vadd.f32 %v477, %v478
    %v480 = vrot.slane %v479, 2
    %v481 = vadd.f32 %v479, %v480
    %v482 = vrot.slane %v481, 1
    %v483 = vadd.f32 %v481, %v482
    %v484 = vadd.f32 %v373, %v376
    %v485 = vrot.slane %v484, 4
    %v486 = vadd.f32 %v484, %v485
    %v487 = vrot.slane %v486, 2
    %v488 = vadd.f32 %v486, %v487
    %v489 = vrot.slane %v488, 1
    %v490 = vadd.f32 %v488, %v489
    %v491 = vrcp.pop 16.0
    %v492 = vmul.f32 %v385, %v491
    %v493 = vmul.f32 %v392, %v491
    %v494 = vmul.f32 %v399, %v491
    %v495 = vmul.f32 %v406, %v491
    %v496 = vmul.f32 %v413, %v491
    %v497 = vmul.f32 %v420, %v491
    %v498 = vmul.f32 %v427, %v491
    %v499 = vmul.f32 %v434, %v491
    %v500 = vmul.f32 %v441, %v491
    %v501 = vmul.f32 %v448, %v491
    %v502 = vmul.f32 %v455, %v491
    %v503 = vmul.f32 %v462, %v491
    %v504 = vmul.f32 %v469, %v491
    %v505 = vmul.f32 %v476, %v491
    %v506 = vmul.f32 %v483, %v491
    %v507 = vmul.f32 %v490, %v491
    %v508 = vpack.c.bf16 %v492, %v492
    %v509 = vpack.c.bf16 %v493, %v493
    %v510 = vpack.c.bf16 %v494, %v494
    %v511 = vpack.c.bf16 %v495, %v495
    %v512 = vpack.c.bf16 %v496, %v496
    %v513 = vpack.c.bf16 %v497, %v497
    %v514 = vpack.c.bf16 %v498, %v498
    %v515 = vpack.c.bf16 %v499, %v499
    %v516 = vpack.c.bf16 %v500, %v500
    %v517 = vpack.c.bf16 %v501, %v501
    %v518 = vpack.c.bf16 %v502, %v502
    %v519 = vpack.c.bf16 %v503, %v503
    %v520 = vpack.c.bf16 %v504, %v504
    %v521 = vpack.c.bf16 %v505, %v505
    %v522 = vpack.c.bf16 %v506, %v506
    %v523 = vpack.c.bf16 %v507, %v507
    %v524 = vld [vmem:[%s4] sm:$0xff]
    %v525 = vld [vmem:[%s4 + $0x8] sm:$0xff]
    %v526 = vld [vmem:[%s4 + $0x10] sm:$0xff]
    %v527 = vld [vmem:[%s4 + $0x18] sm:$0xff]
    %v528 = vld [vmem:[%s4 + $0x20] sm:$0xff]
    %v529 = vld [vmem:[%s4 + $0x28] sm:$0xff]
    %v530 = vld [vmem:[%s4 + $0x30] sm:$0xff]
    %v531 = vld [vmem:[%s4 + $0x38] sm:$0xff]
    %v532 = vld [vmem:[%s4 + $0x40] sm:$0xff]
    %v533 = vld [vmem:[%s4 + $0x48] sm:$0xff]
    %v534 = vld [vmem:[%s4 + $0x50] sm:$0xff]
    %v535 = vld [vmem:[%s4 + $0x58] sm:$0xff]
    %v536 = vld [vmem:[%s4 + $0x60] sm:$0xff]
    %v537 = vld [vmem:[%s4 + $0x68] sm:$0xff]
    %v538 = vld [vmem:[%s4 + $0x70] sm:$0xff]
    %v539 = vld [vmem:[%s4 + $0x78] sm:$0xff]
    %v540 = vld [vmem:[%s4 + $0x80] sm:$0xff]
    %v541 = vld [vmem:[%s4 + $0x88] sm:$0xff]
    %v542 = vld [vmem:[%s4 + $0x90] sm:$0xff]
    %v543 = vld [vmem:[%s4 + $0x98] sm:$0xff]
    %v544 = vld [vmem:[%s4 + $0xa0] sm:$0xff]
    %v545 = vld [vmem:[%s4 + $0xa8] sm:$0xff]
    %v546 = vld [vmem:[%s4 + $0xb0] sm:$0xff]
    %v547 = vld [vmem:[%s4 + $0xb8] sm:$0xff]
    %v548 = vld [vmem:[%s4 + $0xc0] sm:$0xff]
    %v549 = vld [vmem:[%s4 + $0xc8] sm:$0xff]
    %v550 = vld [vmem:[%s4 + $0xd0] sm:$0xff]
    %v551 = vld [vmem:[%s4 + $0xd8] sm:$0xff]
    %v552 = vld [vmem:[%s4 + $0xe0] sm:$0xff]
    %v553 = vld [vmem:[%s4 + $0xe8] sm:$0xff]
    %v554 = vld [vmem:[%s4 + $0xf0] sm:$0xff]
    %v555 = vld [vmem:[%s4 + $0xf8] sm:$0xff]
    %v556 = vld [vmem:[%s5] sm:$0xf]
    %v558 = vlaneseq
    %v559 = vshrl.u32 %v558, 7
    %v560 = vsub.s32 0, %v559
    %v561 = vrot.slane %v556, %v560
    %v562 = vlaneseq
    %v563 = vshrl.u32 %v562, 7
    %v564 = vsub.s32 1, %v563
    %v565 = vrot.slane %v556, %v564
    %v566 = vlaneseq
    %v567 = vshrl.u32 %v566, 7
    %v568 = vsub.s32 2, %v567
    %v569 = vrot.slane %v556, %v568
    %v570 = vlaneseq
    %v571 = vshrl.u32 %v570, 7
    %v572 = vsub.s32 3, %v571
    %v573 = vrot.slane %v556, %v572
    %v594 = vunpack.c.l.b16 %v508
    %v595 = vunpack.c.l.b16 %v509
    %v596 = vunpack.c.l.b16 %v510
    %v597 = vunpack.c.l.b16 %v511
    %v598 = vunpack.c.l.b16 %v512
    %v599 = vunpack.c.l.b16 %v513
    %v600 = vunpack.c.l.b16 %v514
    %v601 = vunpack.c.l.b16 %v515
    %v602 = vunpack.c.l.b16 %v516
    %v603 = vunpack.c.l.b16 %v517
    %v604 = vunpack.c.l.b16 %v518
    %v605 = vunpack.c.l.b16 %v519
    %v606 = vunpack.c.l.b16 %v520
    %v607 = vunpack.c.l.b16 %v521
    %v608 = vunpack.c.l.b16 %v522
    %v609 = vunpack.c.l.b16 %v523
    %vm610 = vcmask 1041409
    %v611 = vsel %vm610, %v595, %v594
    %vm612 = vcmask 1042434
    %v613 = vsel %vm612, %v596, %v611
    %vm614 = vcmask 1043459
    %v615 = vsel %vm614, %v597, %v613
    %vm616 = vcmask 1044484
    %v617 = vsel %vm616, %v598, %v615
    %vm618 = vcmask 1045509
    %v619 = vsel %vm618, %v599, %v617
    %vm620 = vcmask 1046534
    %v621 = vsel %vm620, %v600, %v619
    %vm622 = vcmask 1047559
    %v623 = vsel %vm622, %v601, %v621
    %v624 = vsel %vm610, %v603, %v602
    %v625 = vsel %vm612, %v604, %v624
    %v626 = vsel %vm614, %v605, %v625
    %v627 = vsel %vm616, %v606, %v626
    %v628 = vsel %vm618, %v607, %v627
    %v629 = vsel %vm620, %v608, %v628
    %v630 = vsel %vm622, %v609, %v629
    %v631 = vpack.c.b16 %v630, %v623
    %v665 = vunpack.c.l.b16 %v524
    %v666 = vunpack.c.h.b16 %v524
    %v667 = vunpack.c.l.b16 %v525
    %v668 = vunpack.c.h.b16 %v525
    %v669 = vunpack.c.l.b16 %v526
    %v670 = vunpack.c.h.b16 %v526
    %v671 = vunpack.c.l.b16 %v527
    %v672 = vunpack.c.h.b16 %v527
    %v673 = vunpack.c.l.b16 %v528
    %v674 = vunpack.c.h.b16 %v528
    %v675 = vunpack.c.l.b16 %v529
    %v676 = vunpack.c.h.b16 %v529
    %v677 = vunpack.c.l.b16 %v530
    %v678 = vunpack.c.h.b16 %v530
    %v679 = vunpack.c.l.b16 %v531
    %v680 = vunpack.c.h.b16 %v531
    %v681 = vunpack.c.l.b16 %v532
    %v682 = vunpack.c.h.b16 %v532
    %v683 = vunpack.c.l.b16 %v533
    %v684 = vunpack.c.h.b16 %v533
    %v685 = vunpack.c.l.b16 %v534
    %v686 = vunpack.c.h.b16 %v534
    %v687 = vunpack.c.l.b16 %v535
    %v688 = vunpack.c.h.b16 %v535
    %v689 = vunpack.c.l.b16 %v536
    %v690 = vunpack.c.h.b16 %v536
    %v691 = vunpack.c.l.b16 %v537
    %v692 = vunpack.c.h.b16 %v537
    %v693 = vunpack.c.l.b16 %v538
    %v694 = vunpack.c.h.b16 %v538
    %v695 = vunpack.c.l.b16 %v539
    %v696 = vunpack.c.h.b16 %v539
    %v697 = vunpack.c.l.b16 %v540
    %v698 = vunpack.c.h.b16 %v540
    %v699 = vunpack.c.l.b16 %v541
    %v700 = vunpack.c.h.b16 %v541
    %v701 = vunpack.c.l.b16 %v542
    %v702 = vunpack.c.h.b16 %v542
    %v703 = vunpack.c.l.b16 %v543
    %v704 = vunpack.c.h.b16 %v543
    %v705 = vunpack.c.l.b16 %v544
    %v706 = vunpack.c.h.b16 %v544
    %v707 = vunpack.c.l.b16 %v545
    %v708 = vunpack.c.h.b16 %v545
    %v709 = vunpack.c.l.b16 %v546
    %v710 = vunpack.c.h.b16 %v546
    %v711 = vunpack.c.l.b16 %v547
    %v712 = vunpack.c.h.b16 %v547
    %v713 = vunpack.c.l.b16 %v548
    %v714 = vunpack.c.h.b16 %v548
    %v715 = vunpack.c.l.b16 %v549
    %v716 = vunpack.c.h.b16 %v549
    %v717 = vunpack.c.l.b16 %v550
    %v718 = vunpack.c.h.b16 %v550
    %v719 = vunpack.c.l.b16 %v551
    %v720 = vunpack.c.h.b16 %v551
    %v721 = vunpack.c.l.b16 %v552
    %v722 = vunpack.c.h.b16 %v552
    %v723 = vunpack.c.l.b16 %v553
    %v724 = vunpack.c.h.b16 %v553
    %v725 = vunpack.c.l.b16 %v554
    %v726 = vunpack.c.h.b16 %v554
    %v727 = vunpack.c.l.b16 %v555
    %v728 = vunpack.c.h.b16 %v555
    %v729 = vpack.c.b16 %v669, %v665
    %v730 = vpack.c.b16 %v670, %v666
    %v731 = vpack.c.b16 %v671, %v667
    %v732 = vpack.c.b16 %v672, %v668
    %v733 = vpack.c.b16 %v677, %v673
    %v734 = vpack.c.b16 %v678, %v674
    %v735 = vpack.c.b16 %v679, %v675
    %v736 = vpack.c.b16 %v680, %v676
    %v737 = vpack.c.b16 %v685, %v681
    %v738 = vpack.c.b16 %v686, %v682
    %v739 = vpack.c.b16 %v687, %v683
    %v740 = vpack.c.b16 %v688, %v684
    %v741 = vpack.c.b16 %v693, %v689
    %v742 = vpack.c.b16 %v694, %v690
    %v743 = vpack.c.b16 %v695, %v691
    %v744 = vpack.c.b16 %v696, %v692
    %v745 = vpack.c.b16 %v701, %v697
    %v746 = vpack.c.b16 %v702, %v698
    %v747 = vpack.c.b16 %v703, %v699
    %v748 = vpack.c.b16 %v704, %v700
    %v749 = vpack.c.b16 %v709, %v705
    %v750 = vpack.c.b16 %v710, %v706
    %v751 = vpack.c.b16 %v711, %v707
    %v752 = vpack.c.b16 %v712, %v708
    %v753 = vpack.c.b16 %v717, %v713
    %v754 = vpack.c.b16 %v718, %v714
    %v755 = vpack.c.b16 %v719, %v715
    %v756 = vpack.c.b16 %v720, %v716
    %v757 = vpack.c.b16 %v725, %v721
    %v758 = vpack.c.b16 %v726, %v722
    %v759 = vpack.c.b16 %v727, %v723
    %v760 = vpack.c.b16 %v728, %v724
    %793 = vmatprep.subr.bf16.mxu0 %v758
    %794 = vmatpush1.bf16.msra.mxu0 %v757
    %795 = vmatprep.subr.bf16.mxu0 %v754
    %796 = vmatpush1.bf16.msra.mxu0 %v753
    %797 = vmatprep.subr.bf16.mxu0 %v750
    %798 = vmatpush1.bf16.msra.mxu0 %v749
    %799 = vmatprep.subr.bf16.mxu0 %v746
    %800 = vmatpush1.bf16.msra.mxu0 %v745
    %801 = vmatprep.subr.bf16.mxu0 %v742
    %802 = vmatpush1.bf16.msra.mxu0 %v741
    %803 = vmatprep.subr.bf16.mxu0 %v738
    %804 = vmatpush1.bf16.msra.mxu0 %v737
    %805 = vmatprep.subr.bf16.mxu0 %v734
    %806 = vmatpush1.bf16.msra.mxu0 %v733
    %807 = vmatprep.subr.bf16.mxu0 %v730
    %808 = vmatpush1.bf16.msra.mxu0 %v729
    %809 = vmatprep.subr.bf16.mxu0 0
    %810 = vmatpush2.bf16.msra.mxu0 0
    %811 = vmatprep.subr.bf16.mxu0 0
    %812 = vmatpush2.bf16.msra.mxu0 0
    %813 = vmatprep.subr.bf16.mxu0 0
    %814 = vmatpush2.bf16.msra.mxu0 0
    %815 = vmatprep.subr.bf16.mxu0 0
    %816 = vmatpush2.bf16.msra.mxu0 0
    %817 = vmatprep.subr.bf16.mxu0 0
    %818 = vmatpush2.bf16.msra.mxu0 0
    %819 = vmatprep.subr.bf16.mxu0 0
    %820 = vmatpush2.bf16.msra.mxu0 0
    %821 = vmatprep.subr.bf16.mxu0 0
    %822 = vmatpush2.bf16.msra.mxu0 0
    %823 = vmatprep.subr.bf16.mxu0 0
    %824 = vmatpush2.bf16.msra.mxu0 0
    %825 = vmatprep.mubr.bf16.mxu0 0
    %826 = vmatmul.mubr.bf16.gmra.mxu0 %v631
    %v827 = vpop.f32.mrf.mxu0
    %v828 = vadd.f32 %v561, %v827
    %v829 = vpop.f32.mrf.mxu0
    %v830 = vadd.f32 %v565, %v829
    %v831 = vpop.f32.mrf.mxu0
    %v832 = vadd.f32 %v561, %v831
    %v833 = vpop.f32.mrf.mxu0
    %v834 = vadd.f32 %v565, %v833
    %835 = vdwg.mxu0
    %836 = vmatprep.subr.bf16.mxu0 %v760
    %837 = vmatpush1.bf16.msra.mxu0 %v759
    %838 = vmatprep.subr.bf16.mxu0 %v756
    %839 = vmatpush1.bf16.msra.mxu0 %v755
    %840 = vmatprep.subr.bf16.mxu0 %v752
    %841 = vmatpush1.bf16.msra.mxu0 %v751
    %842 = vmatprep.subr.bf16.mxu0 %v748
    %843 = vmatpush1.bf16.msra.mxu0 %v747
    %844 = vmatprep.subr.bf16.mxu0 %v744
    %845 = vmatpush1.bf16.msra.mxu0 %v743
    %846 = vmatprep.subr.bf16.mxu0 %v740
    %847 = vmatpush1.bf16.msra.mxu0 %v739
    %848 = vmatprep.subr.bf16.mxu0 %v736
    %849 = vmatpush1.bf16.msra.mxu0 %v735
    %850 = vmatprep.subr.bf16.mxu0 %v732
    %851 = vmatpush1.bf16.msra.mxu0 %v731
    %852 = vmatprep.subr.bf16.mxu0 0
    %853 = vmatpush2.bf16.msra.mxu0 0
    %854 = vmatprep.subr.bf16.mxu0 0
    %855 = vmatpush2.bf16.msra.mxu0 0
    %856 = vmatprep.subr.bf16.mxu0 0
    %857 = vmatpush2.bf16.msra.mxu0 0
    %858 = vmatprep.subr.bf16.mxu0 0
    %859 = vmatpush2.bf16.msra.mxu0 0
    %860 = vmatprep.subr.bf16.mxu0 0
    %861 = vmatpush2.bf16.msra.mxu0 0
    %862 = vmatprep.subr.bf16.mxu0 0
    %863 = vmatpush2.bf16.msra.mxu0 0
    %864 = vmatprep.subr.bf16.mxu0 0
    %865 = vmatpush2.bf16.msra.mxu0 0
    %866 = vmatprep.subr.bf16.mxu0 0
    %867 = vmatpush2.bf16.msra.mxu0 0
    %868 = vmatprep.mubr.bf16.mxu0 0
    %869 = vmatmul.mubr.bf16.gmra.mxu0 %v631
    %v870 = vpop.f32.mrf.mxu0
    %v871 = vadd.f32 %v569, %v870
    %v872 = vpop.f32.mrf.mxu0
    %v873 = vadd.f32 %v573, %v872
    %v874 = vpop.f32.mrf.mxu0
    %v875 = vadd.f32 %v569, %v874
    %v876 = vpop.f32.mrf.mxu0
    %v877 = vadd.f32 %v573, %v876
    %878 = vdwg.mxu0
    %v879 = vmax.f32 %v828, 0.0
    %v880 = vmax.f32 %v830, 0.0
    %v881 = vmax.f32 %v871, 0.0
    %v882 = vmax.f32 %v873, 0.0
    %v883 = vmax.f32 %v832, 0.0
    %v884 = vmax.f32 %v834, 0.0
    %v885 = vmax.f32 %v875, 0.0
    %v886 = vmax.f32 %v877, 0.0
    %v887 = vld [vmem:[%s6] sm:$0xf]
    %v889 = vlaneseq
    %v890 = vshrl.u32 %v889, 7
    %v891 = vsub.s32 0, %v890
    %v892 = vrot.slane %v887, %v891
    %v893 = vlaneseq
    %v894 = vshrl.u32 %v893, 7
    %v895 = vsub.s32 1, %v894
    %v896 = vrot.slane %v887, %v895
    %v897 = vlaneseq
    %v898 = vshrl.u32 %v897, 7
    %v899 = vsub.s32 2, %v898
    %v900 = vrot.slane %v887, %v899
    %v901 = vlaneseq
    %v902 = vshrl.u32 %v901, 7
    %v903 = vsub.s32 3, %v902
    %v904 = vrot.slane %v887, %v903
    %v909 = vmul.f32 %v879, %v892
    %v910 = vmul.f32 %v880, %v896
    %v911 = vmul.f32 %v881, %v900
    %v912 = vmul.f32 %v882, %v904
    %v913 = vmul.f32 %v883, %v892
    %v914 = vmul.f32 %v884, %v896
    %v915 = vmul.f32 %v885, %v900
    %v916 = vmul.f32 %v886, %v904
    %v917 = vadd.f32 %v909, %v910
    %v918 = vadd.f32 %v917, %v911
    %v919 = vadd.f32 %v918, %v912
    %920 = vadd.xlane.f32.xlu0 %v919
    %v921 = vpop.xlane.xlu0 %920
    %v922 = vadd.f32 %v913, %v914
    %v923 = vadd.f32 %v922, %v915
    %v924 = vadd.f32 %v923, %v916
    %925 = vadd.xlane.f32.xlu0 %v924
    %v926 = vpop.xlane.xlu0 %925
    %v927 = vld [vmem:[#allocation2] sm:$0x1]
    %v929 = vlaneseq
    %v930 = vshrl.u32 %v929, 7
    %v931 = vsub.s32 0, %v930
    %v932 = vrot.slane %v927, %v931
    %v934 = vadd.f32 %v921, %v932
    %v935 = vadd.f32 %v926, %v932
    %v936 = vlaneseq
    %v937 = vshrl.u32 %v936, 7
    %v938 = vadd.s32 %v937, 8
    %vm939 = vcmp.ge.s32.totalorder %v937, 0
    %vm940 = vcmp.ge.s32.totalorder %v938, 0
    %vm941 = vcmp.lt.s32.totalorder %v937, 4
    %vm942 = vcmp.lt.s32.totalorder %v938, 4
    %vm943 = vmand %vm939, %vm941
    %vm944 = vmand %vm940, %vm942
    %v945 = vsel %vm943, %v934, -1e+30
    %v946 = vsel %vm944, %v935, -1e+30
    %vm947 = vcmask 7168
    %v948 = vsel %vm947, %v945, -inf
    %v949 = vsel %vm947, %v946, -inf
    %v950 = vmax.f32 %v948, %v949
    %951 = vmax.xlane.f32.xlu0 %v950
    %v952 = vpop.xlane.xlu0 %951
    %v953 = vrot.slane %v952, 4
    %v954 = vmax.f32 %v952, %v953
    %v955 = vrot.slane %v954, 2
    %v956 = vmax.f32 %v954, %v955
    %v957 = vrot.slane %v956, 1
    %v958 = vmax.f32 %v956, %v957
    %s959 = vtos %v958
    %v960 = vstv %s959
    %v961 = vsub.f32 %v945, %v960
    %v962 = vsub.f32 %v946, %v960
    %v963 = vmul.f32 %v961, 1.442695
    %v964 = vpow.pop %v963
    %v965 = vmul.f32 %v962, 1.442695
    %v966 = vpow.pop %v965
    %v967 = vsel %vm943, %v964, 0.0
    %v968 = vsel %vm944, %v966, 0.0
    %v969 = vsel %vm947, %v967, 0.0
    %v970 = vsel %vm947, %v968, 0.0
    %v971 = vadd.f32 %v969, %v970
    %v972 = vrot.slane %v971, 4
    %v973 = vadd.f32 %v971, %v972
    %v974 = vrot.slane %v973, 2
    %v975 = vadd.f32 %v973, %v974
    %v976 = vrot.slane %v975, 1
    %v977 = vadd.f32 %v975, %v976
    %v978 = vrcp.pop %v977
    %v979 = vmul.f32 %v967, %v978
    %v980 = vmul.f32 %v968, %v978
    %982 = vset.pattern.permute.xlu0 0
    %983 = vperm.xlu0 %982, %v979
    %v984 = vpop.permute.xlu0 %983
    %986 = vset.pattern.permute.xlu0 0
    %987 = vperm.xlu0 %986, %v980
    %v988 = vpop.permute.xlu0 %987
    %v989 = vrot.slane %v984, 1
    %v990 = vrot.slane %v984, 2
    %v991 = vrot.slane %v984, 3
    %v992 = vrot.slane %v984, 4
    %v993 = vrot.slane %v984, 5
    %v994 = vrot.slane %v984, 6
    %v995 = vrot.slane %v984, 7
    %v996 = vrot.slane %v988, 1
    %v997 = vrot.slane %v988, 2
    %v998 = vrot.slane %v988, 3
    %v999 = vrot.slane %v988, 4
    %v1000 = vrot.slane %v988, 5
    %v1001 = vrot.slane %v988, 6
    %v1002 = vrot.slane %v988, 7
    %v1019 = vmul.f32 %v492, %v984
    %v1020 = vmul.f32 %v493, %v989
    %v1021 = vmul.f32 %v494, %v990
    %v1022 = vmul.f32 %v495, %v991
    %v1023 = vmul.f32 %v496, %v992
    %v1024 = vmul.f32 %v497, %v993
    %v1025 = vmul.f32 %v498, %v994
    %v1026 = vmul.f32 %v499, %v995
    %v1027 = vmul.f32 %v500, %v988
    %v1028 = vmul.f32 %v501, %v996
    %v1029 = vmul.f32 %v502, %v997
    %v1030 = vmul.f32 %v503, %v998
    %v1031 = vmul.f32 %v504, %v999
    %v1032 = vmul.f32 %v505, %v1000
    %v1033 = vmul.f32 %v506, %v1001
    %v1034 = vmul.f32 %v507, %v1002
    %v1051 = vrot.slane %v1020, 7
    %v1052 = vsel %vm610, %v1051, %v1019
    %v1053 = vrot.slane %v1021, 6
    %v1054 = vsel %vm612, %v1053, %v1052
    %v1055 = vrot.slane %v1022, 5
    %v1056 = vsel %vm614, %v1055, %v1054
    %v1057 = vrot.slane %v1023, 4
    %v1058 = vsel %vm616, %v1057, %v1056
    %v1059 = vrot.slane %v1024, 3
    %v1060 = vsel %vm618, %v1059, %v1058
    %v1061 = vrot.slane %v1025, 2
    %v1062 = vsel %vm620, %v1061, %v1060
    %v1063 = vrot.slane %v1026, 1
    %v1064 = vsel %vm622, %v1063, %v1062
    %v1065 = vrot.slane %v1028, 7
    %v1066 = vsel %vm610, %v1065, %v1027
    %v1067 = vrot.slane %v1029, 6
    %v1068 = vsel %vm612, %v1067, %v1066
    %v1069 = vrot.slane %v1030, 5
    %v1070 = vsel %vm614, %v1069, %v1068
    %v1071 = vrot.slane %v1031, 4
    %v1072 = vsel %vm616, %v1071, %v1070
    %v1073 = vrot.slane %v1032, 3
    %v1074 = vsel %vm618, %v1073, %v1072
    %v1075 = vrot.slane %v1033, 2
    %v1076 = vsel %vm620, %v1075, %v1074
    %v1077 = vrot.slane %v1034, 1
    %v1078 = vsel %vm622, %v1077, %v1076
    %v1081 = vadd.f32 %v1064, %v1078
    %v1082 = vrot.slane %v1081, 4
    %v1083 = vadd.f32 %v1081, %v1082
    %v1084 = vrot.slane %v1083, 2
    %v1085 = vadd.f32 %v1083, %v1084
    %v1086 = vrot.slane %v1085, 1
    %v1087 = vadd.f32 %v1085, %v1086
    %vm1088 = vcmp.eq.s32.totalorder %v937, 0
    %v1089 = vlaneseq
    %v1090 = vshrl.u32 %v1089, 7
    %v1091 = vsub.s32 0, %v1090
    %v1092 = vrot.slane %v1087, %v1091
    %v1093 = vsel %vm1088, %v1092, 0.0
    %vm1094 = vcmp.ge.s32.totalorder %v937, 4
    %vm1095 = vcmp.ge.s32.totalorder %v938, 4
    %vm1096 = vcmp.lt.s32.totalorder %v937, 8
    %vm1097 = vcmp.lt.s32.totalorder %v938, 8
    %vm1098 = vmand %vm1094, %vm1096
    %vm1099 = vmand %vm1095, %vm1097
    %v1100 = vsel %vm1098, %v934, -1e+30
    %v1101 = vsel %vm1099, %v935, -1e+30
    %v1102 = vsel %vm947, %v1100, -inf
    %v1103 = vsel %vm947, %v1101, -inf
    %v1104 = vmax.f32 %v1102, %v1103
    %1105 = vmax.xlane.f32.xlu0 %v1104
    %v1106 = vpop.xlane.xlu0 %1105
    %v1107 = vrot.slane %v1106, 4
    %v1108 = vmax.f32 %v1106, %v1107
    %v1109 = vrot.slane %v1108, 2
    %v1110 = vmax.f32 %v1108, %v1109
    %v1111 = vrot.slane %v1110, 1
    %v1112 = vmax.f32 %v1110, %v1111
    %s1113 = vtos %v1112
    %v1114 = vstv %s1113
    %v1115 = vsub.f32 %v1100, %v1114
    %v1116 = vsub.f32 %v1101, %v1114
    %v1117 = vmul.f32 %v1115, 1.442695
    %v1118 = vpow.pop %v1117
    %v1119 = vmul.f32 %v1116, 1.442695
    %v1120 = vpow.pop %v1119
    %v1121 = vsel %vm1098, %v1118, 0.0
    %v1122 = vsel %vm1099, %v1120, 0.0
    %v1123 = vsel %vm947, %v1121, 0.0
    %v1124 = vsel %vm947, %v1122, 0.0
    %v1125 = vadd.f32 %v1123, %v1124
    %v1126 = vrot.slane %v1125, 4
    %v1127 = vadd.f32 %v1125, %v1126
    %v1128 = vrot.slane %v1127, 2
    %v1129 = vadd.f32 %v1127, %v1128
    %v1130 = vrot.slane %v1129, 1
    %v1131 = vadd.f32 %v1129, %v1130
    %v1132 = vrcp.pop %v1131
    %v1133 = vmul.f32 %v1121, %v1132
    %v1134 = vmul.f32 %v1122, %v1132
    %1136 = vset.pattern.permute.xlu0 0
    %1137 = vperm.xlu0 %1136, %v1133
    %v1138 = vpop.permute.xlu0 %1137
    %1140 = vset.pattern.permute.xlu0 0
    %1141 = vperm.xlu0 %1140, %v1134
    %v1142 = vpop.permute.xlu0 %1141
    %v1143 = vrot.slane %v1138, 1
    %v1144 = vrot.slane %v1138, 2
    %v1145 = vrot.slane %v1138, 3
    %v1146 = vrot.slane %v1138, 4
    %v1147 = vrot.slane %v1138, 5
    %v1148 = vrot.slane %v1138, 6
    %v1149 = vrot.slane %v1138, 7
    %v1150 = vrot.slane %v1142, 1
    %v1151 = vrot.slane %v1142, 2
    %v1152 = vrot.slane %v1142, 3
    %v1153 = vrot.slane %v1142, 4
    %v1154 = vrot.slane %v1142, 5
    %v1155 = vrot.slane %v1142, 6
    %v1156 = vrot.slane %v1142, 7
    %v1173 = vmul.f32 %v492, %v1138
    %v1174 = vmul.f32 %v493, %v1143
    %v1175 = vmul.f32 %v494, %v1144
    %v1176 = vmul.f32 %v495, %v1145
    %v1177 = vmul.f32 %v496, %v1146
    %v1178 = vmul.f32 %v497, %v1147
    %v1179 = vmul.f32 %v498, %v1148
    %v1180 = vmul.f32 %v499, %v1149
    %v1181 = vmul.f32 %v500, %v1142
    %v1182 = vmul.f32 %v501, %v1150
    %v1183 = vmul.f32 %v502, %v1151
    %v1184 = vmul.f32 %v503, %v1152
    %v1185 = vmul.f32 %v504, %v1153
    %v1186 = vmul.f32 %v505, %v1154
    %v1187 = vmul.f32 %v506, %v1155
    %v1188 = vmul.f32 %v507, %v1156
    %v1205 = vrot.slane %v1174, 7
    %v1206 = vsel %vm610, %v1205, %v1173
    %v1207 = vrot.slane %v1175, 6
    %v1208 = vsel %vm612, %v1207, %v1206
    %v1209 = vrot.slane %v1176, 5
    %v1210 = vsel %vm614, %v1209, %v1208
    %v1211 = vrot.slane %v1177, 4
    %v1212 = vsel %vm616, %v1211, %v1210
    %v1213 = vrot.slane %v1178, 3
    %v1214 = vsel %vm618, %v1213, %v1212
    %v1215 = vrot.slane %v1179, 2
    %v1216 = vsel %vm620, %v1215, %v1214
    %v1217 = vrot.slane %v1180, 1
    %v1218 = vsel %vm622, %v1217, %v1216
    %v1219 = vrot.slane %v1182, 7
    %v1220 = vsel %vm610, %v1219, %v1181
    %v1221 = vrot.slane %v1183, 6
    %v1222 = vsel %vm612, %v1221, %v1220
    %v1223 = vrot.slane %v1184, 5
    %v1224 = vsel %vm614, %v1223, %v1222
    %v1225 = vrot.slane %v1185, 4
    %v1226 = vsel %vm616, %v1225, %v1224
    %v1227 = vrot.slane %v1186, 3
    %v1228 = vsel %vm618, %v1227, %v1226
    %v1229 = vrot.slane %v1187, 2
    %v1230 = vsel %vm620, %v1229, %v1228
    %v1231 = vrot.slane %v1188, 1
    %v1232 = vsel %vm622, %v1231, %v1230
    %v1235 = vadd.f32 %v1218, %v1232
    %v1236 = vrot.slane %v1235, 4
    %v1237 = vadd.f32 %v1235, %v1236
    %v1238 = vrot.slane %v1237, 2
    %v1239 = vadd.f32 %v1237, %v1238
    %v1240 = vrot.slane %v1239, 1
    %v1241 = vadd.f32 %v1239, %v1240
    %vm1242 = vcmp.eq.s32.totalorder %v937, 1
    %v1243 = vlaneseq
    %v1244 = vshrl.u32 %v1243, 7
    %v1245 = vsub.s32 0, %v1244
    %v1246 = vrot.slane %v1241, %v1245
    %v1247 = vsel %vm1242, %v1246, %v1093
    %vm1248 = vcmp.ge.s32.totalorder %v937, 8
    %vm1249 = vcmp.ge.s32.totalorder %v938, 8
    %vm1250 = vcmp.lt.s32.totalorder %v937, 12
    %vm1251 = vcmp.lt.s32.totalorder %v938, 12
    %vm1252 = vmand %vm1248, %vm1250
    %vm1253 = vmand %vm1249, %vm1251
    %v1254 = vsel %vm1252, %v934, -1e+30
    %v1255 = vsel %vm1253, %v935, -1e+30
    %v1256 = vsel %vm947, %v1254, -inf
    %v1257 = vsel %vm947, %v1255, -inf
    %v1258 = vmax.f32 %v1256, %v1257
    %1259 = vmax.xlane.f32.xlu0 %v1258
    %v1260 = vpop.xlane.xlu0 %1259
    %v1261 = vrot.slane %v1260, 4
    %v1262 = vmax.f32 %v1260, %v1261
    %v1263 = vrot.slane %v1262, 2
    %v1264 = vmax.f32 %v1262, %v1263
    %v1265 = vrot.slane %v1264, 1
    %v1266 = vmax.f32 %v1264, %v1265
    %s1267 = vtos %v1266
    %v1268 = vstv %s1267
    %v1269 = vsub.f32 %v1254, %v1268
    %v1270 = vsub.f32 %v1255, %v1268
    %v1271 = vmul.f32 %v1269, 1.442695
    %v1272 = vpow.pop %v1271
    %v1273 = vmul.f32 %v1270, 1.442695
    %v1274 = vpow.pop %v1273
    %v1275 = vsel %vm1252, %v1272, 0.0
    %v1276 = vsel %vm1253, %v1274, 0.0
    %v1277 = vsel %vm947, %v1275, 0.0
    %v1278 = vsel %vm947, %v1276, 0.0
    %v1279 = vadd.f32 %v1277, %v1278
    %v1280 = vrot.slane %v1279, 4
    %v1281 = vadd.f32 %v1279, %v1280
    %v1282 = vrot.slane %v1281, 2
    %v1283 = vadd.f32 %v1281, %v1282
    %v1284 = vrot.slane %v1283, 1
    %v1285 = vadd.f32 %v1283, %v1284
    %v1286 = vrcp.pop %v1285
    %v1287 = vmul.f32 %v1275, %v1286
    %v1288 = vmul.f32 %v1276, %v1286
    %1290 = vset.pattern.permute.xlu0 0
    %1291 = vperm.xlu0 %1290, %v1287
    %v1292 = vpop.permute.xlu0 %1291
    %1294 = vset.pattern.permute.xlu0 0
    %1295 = vperm.xlu0 %1294, %v1288
    %v1296 = vpop.permute.xlu0 %1295
    %v1297 = vrot.slane %v1292, 1
    %v1298 = vrot.slane %v1292, 2
    %v1299 = vrot.slane %v1292, 3
    %v1300 = vrot.slane %v1292, 4
    %v1301 = vrot.slane %v1292, 5
    %v1302 = vrot.slane %v1292, 6
    %v1303 = vrot.slane %v1292, 7
    %v1304 = vrot.slane %v1296, 1
    %v1305 = vrot.slane %v1296, 2
    %v1306 = vrot.slane %v1296, 3
    %v1307 = vrot.slane %v1296, 4
    %v1308 = vrot.slane %v1296, 5
    %v1309 = vrot.slane %v1296, 6
    %v1310 = vrot.slane %v1296, 7
    %v1327 = vmul.f32 %v492, %v1292
    %v1328 = vmul.f32 %v493, %v1297
    %v1329 = vmul.f32 %v494, %v1298
    %v1330 = vmul.f32 %v495, %v1299
    %v1331 = vmul.f32 %v496, %v1300
    %v1332 = vmul.f32 %v497, %v1301
    %v1333 = vmul.f32 %v498, %v1302
    %v1334 = vmul.f32 %v499, %v1303
    %v1335 = vmul.f32 %v500, %v1296
    %v1336 = vmul.f32 %v501, %v1304
    %v1337 = vmul.f32 %v502, %v1305
    %v1338 = vmul.f32 %v503, %v1306
    %v1339 = vmul.f32 %v504, %v1307
    %v1340 = vmul.f32 %v505, %v1308
    %v1341 = vmul.f32 %v506, %v1309
    %v1342 = vmul.f32 %v507, %v1310
    %v1359 = vrot.slane %v1328, 7
    %v1360 = vsel %vm610, %v1359, %v1327
    %v1361 = vrot.slane %v1329, 6
    %v1362 = vsel %vm612, %v1361, %v1360
    %v1363 = vrot.slane %v1330, 5
    %v1364 = vsel %vm614, %v1363, %v1362
    %v1365 = vrot.slane %v1331, 4
    %v1366 = vsel %vm616, %v1365, %v1364
    %v1367 = vrot.slane %v1332, 3
    %v1368 = vsel %vm618, %v1367, %v1366
    %v1369 = vrot.slane %v1333, 2
    %v1370 = vsel %vm620, %v1369, %v1368
    %v1371 = vrot.slane %v1334, 1
    %v1372 = vsel %vm622, %v1371, %v1370
    %v1373 = vrot.slane %v1336, 7
    %v1374 = vsel %vm610, %v1373, %v1335
    %v1375 = vrot.slane %v1337, 6
    %v1376 = vsel %vm612, %v1375, %v1374
    %v1377 = vrot.slane %v1338, 5
    %v1378 = vsel %vm614, %v1377, %v1376
    %v1379 = vrot.slane %v1339, 4
    %v1380 = vsel %vm616, %v1379, %v1378
    %v1381 = vrot.slane %v1340, 3
    %v1382 = vsel %vm618, %v1381, %v1380
    %v1383 = vrot.slane %v1341, 2
    %v1384 = vsel %vm620, %v1383, %v1382
    %v1385 = vrot.slane %v1342, 1
    %v1386 = vsel %vm622, %v1385, %v1384
    %v1389 = vadd.f32 %v1372, %v1386
    %v1390 = vrot.slane %v1389, 4
    %v1391 = vadd.f32 %v1389, %v1390
    %v1392 = vrot.slane %v1391, 2
    %v1393 = vadd.f32 %v1391, %v1392
    %v1394 = vrot.slane %v1393, 1
    %v1395 = vadd.f32 %v1393, %v1394
    %vm1396 = vcmp.eq.s32.totalorder %v937, 2
    %v1397 = vlaneseq
    %v1398 = vshrl.u32 %v1397, 7
    %v1399 = vsub.s32 0, %v1398
    %v1400 = vrot.slane %v1395, %v1399
    %v1401 = vsel %vm1396, %v1400, %v1247
    %vm1402 = vcmp.ge.s32.totalorder %v937, 12
    %vm1403 = vcmp.ge.s32.totalorder %v938, 12
    %vm1404 = vcmp.lt.s32.totalorder %v937, 16
    %vm1405 = vcmp.lt.s32.totalorder %v938, 16
    %vm1406 = vmand %vm1402, %vm1404
    %vm1407 = vmand %vm1403, %vm1405
    %v1408 = vsel %vm1406, %v934, -1e+30
    %v1409 = vsel %vm1407, %v935, -1e+30
    %v1410 = vsel %vm947, %v1408, -inf
    %v1411 = vsel %vm947, %v1409, -inf
    %v1412 = vmax.f32 %v1410, %v1411
    %1413 = vmax.xlane.f32.xlu0 %v1412
    %v1414 = vpop.xlane.xlu0 %1413
    %v1415 = vrot.slane %v1414, 4
    %v1416 = vmax.f32 %v1414, %v1415
    %v1417 = vrot.slane %v1416, 2
    %v1418 = vmax.f32 %v1416, %v1417
    %v1419 = vrot.slane %v1418, 1
    %v1420 = vmax.f32 %v1418, %v1419
    %s1421 = vtos %v1420
    %v1422 = vstv %s1421
    %v1423 = vsub.f32 %v1408, %v1422
    %v1424 = vsub.f32 %v1409, %v1422
    %v1425 = vmul.f32 %v1423, 1.442695
    %v1426 = vpow.pop %v1425
    %v1427 = vmul.f32 %v1424, 1.442695
    %v1428 = vpow.pop %v1427
    %v1429 = vsel %vm1406, %v1426, 0.0
    %v1430 = vsel %vm1407, %v1428, 0.0
    %v1431 = vsel %vm947, %v1429, 0.0
    %v1432 = vsel %vm947, %v1430, 0.0
    %v1433 = vadd.f32 %v1431, %v1432
    %v1434 = vrot.slane %v1433, 4
    %v1435 = vadd.f32 %v1433, %v1434
    %v1436 = vrot.slane %v1435, 2
    %v1437 = vadd.f32 %v1435, %v1436
    %v1438 = vrot.slane %v1437, 1
    %v1439 = vadd.f32 %v1437, %v1438
    %v1440 = vrcp.pop %v1439
    %v1441 = vmul.f32 %v1429, %v1440
    %v1442 = vmul.f32 %v1430, %v1440
    %1444 = vset.pattern.permute.xlu0 0
    %1445 = vperm.xlu0 %1444, %v1441
    %v1446 = vpop.permute.xlu0 %1445
    %1448 = vset.pattern.permute.xlu0 0
    %1449 = vperm.xlu0 %1448, %v1442
    %v1450 = vpop.permute.xlu0 %1449
    %v1451 = vrot.slane %v1446, 1
    %v1452 = vrot.slane %v1446, 2
    %v1453 = vrot.slane %v1446, 3
    %v1454 = vrot.slane %v1446, 4
    %v1455 = vrot.slane %v1446, 5
    %v1456 = vrot.slane %v1446, 6
    %v1457 = vrot.slane %v1446, 7
    %v1458 = vrot.slane %v1450, 1
    %v1459 = vrot.slane %v1450, 2
    %v1460 = vrot.slane %v1450, 3
    %v1461 = vrot.slane %v1450, 4
    %v1462 = vrot.slane %v1450, 5
    %v1463 = vrot.slane %v1450, 6
    %v1464 = vrot.slane %v1450, 7
    %v1481 = vmul.f32 %v492, %v1446
    %v1482 = vmul.f32 %v493, %v1451
    %v1483 = vmul.f32 %v494, %v1452
    %v1484 = vmul.f32 %v495, %v1453
    %v1485 = vmul.f32 %v496, %v1454
    %v1486 = vmul.f32 %v497, %v1455
    %v1487 = vmul.f32 %v498, %v1456
    %v1488 = vmul.f32 %v499, %v1457
    %v1489 = vmul.f32 %v500, %v1450
    %v1490 = vmul.f32 %v501, %v1458
    %v1491 = vmul.f32 %v502, %v1459
    %v1492 = vmul.f32 %v503, %v1460
    %v1493 = vmul.f32 %v504, %v1461
    %v1494 = vmul.f32 %v505, %v1462
    %v1495 = vmul.f32 %v506, %v1463
    %v1496 = vmul.f32 %v507, %v1464
    %v1513 = vrot.slane %v1482, 7
    %v1514 = vsel %vm610, %v1513, %v1481
    %v1515 = vrot.slane %v1483, 6
    %v1516 = vsel %vm612, %v1515, %v1514
    %v1517 = vrot.slane %v1484, 5
    %v1518 = vsel %vm614, %v1517, %v1516
    %v1519 = vrot.slane %v1485, 4
    %v1520 = vsel %vm616, %v1519, %v1518
    %v1521 = vrot.slane %v1486, 3
    %v1522 = vsel %vm618, %v1521, %v1520
    %v1523 = vrot.slane %v1487, 2
    %v1524 = vsel %vm620, %v1523, %v1522
    %v1525 = vrot.slane %v1488, 1
    %v1526 = vsel %vm622, %v1525, %v1524
    %v1527 = vrot.slane %v1490, 7
    %v1528 = vsel %vm610, %v1527, %v1489
    %v1529 = vrot.slane %v1491, 6
    %v1530 = vsel %vm612, %v1529, %v1528
    %v1531 = vrot.slane %v1492, 5
    %v1532 = vsel %vm614, %v1531, %v1530
    %v1533 = vrot.slane %v1493, 4
    %v1534 = vsel %vm616, %v1533, %v1532
    %v1535 = vrot.slane %v1494, 3
    %v1536 = vsel %vm618, %v1535, %v1534
    %v1537 = vrot.slane %v1495, 2
    %v1538 = vsel %vm620, %v1537, %v1536
    %v1539 = vrot.slane %v1496, 1
    %v1540 = vsel %vm622, %v1539, %v1538
    %v1543 = vadd.f32 %v1526, %v1540
    %v1544 = vrot.slane %v1543, 4
    %v1545 = vadd.f32 %v1543, %v1544
    %v1546 = vrot.slane %v1545, 2
    %v1547 = vadd.f32 %v1545, %v1546
    %v1548 = vrot.slane %v1547, 1
    %v1549 = vadd.f32 %v1547, %v1548
    %vm1550 = vcmp.eq.s32.totalorder %v937, 3
    %v1551 = vlaneseq
    %v1552 = vshrl.u32 %v1551, 7
    %v1553 = vsub.s32 0, %v1552
    %v1554 = vrot.slane %v1549, %v1553
    %v1555 = vsel %vm1550, %v1554, %v1401
    %v1556 = vpack.c.bf16 %v1555, %v1555
    %v1557 = vld [vmem:[%s8] sm:$0xf]
    %v1558 = vld [vmem:[%s8 + $0x4] sm:$0xf]
    %v1559 = vld [vmem:[%s8 + $0x8] sm:$0xf]
    %v1560 = vld [vmem:[%s8 + $0xc] sm:$0xf]
    %v1561 = vld [vmem:[%s8 + $0x10] sm:$0xf]
    %v1562 = vld [vmem:[%s8 + $0x14] sm:$0xf]
    %v1563 = vld [vmem:[%s8 + $0x18] sm:$0xf]
    %v1564 = vld [vmem:[%s8 + $0x1c] sm:$0xf]
    %v1565 = vld [vmem:[%s8 + $0x20] sm:$0xf]
    %v1566 = vld [vmem:[%s8 + $0x24] sm:$0xf]
    %v1567 = vld [vmem:[%s8 + $0x28] sm:$0xf]
    %v1568 = vld [vmem:[%s8 + $0x2c] sm:$0xf]
    %v1569 = vld [vmem:[%s8 + $0x30] sm:$0xf]
    %v1570 = vld [vmem:[%s8 + $0x34] sm:$0xf]
    %v1571 = vld [vmem:[%s8 + $0x38] sm:$0xf]
    %v1572 = vld [vmem:[%s8 + $0x3c] sm:$0xf]
    %v1573 = vld [vmem:[%s9] sm:$0x1]
    %v1575 = vlaneseq
    %v1576 = vshrl.u32 %v1575, 7
    %v1577 = vsub.s32 0, %v1576
    %v1578 = vrot.slane %v1573, %v1577
    %v1596 = vunpack.c.l.b16 %v1557
    %v1597 = vunpack.c.l.b16 %v1558
    %v1598 = vunpack.c.l.b16 %v1559
    %v1599 = vunpack.c.l.b16 %v1560
    %v1600 = vunpack.c.l.b16 %v1561
    %v1601 = vunpack.c.l.b16 %v1562
    %v1602 = vunpack.c.l.b16 %v1563
    %v1603 = vunpack.c.l.b16 %v1564
    %v1604 = vunpack.c.l.b16 %v1565
    %v1605 = vunpack.c.l.b16 %v1566
    %v1606 = vunpack.c.l.b16 %v1567
    %v1607 = vunpack.c.l.b16 %v1568
    %v1608 = vunpack.c.l.b16 %v1569
    %v1609 = vunpack.c.l.b16 %v1570
    %v1610 = vunpack.c.l.b16 %v1571
    %v1611 = vunpack.c.l.b16 %v1572
    %v1612 = vpack.c.b16 %v1597, %v1596
    %v1613 = vpack.c.b16 %v1599, %v1598
    %v1614 = vpack.c.b16 %v1601, %v1600
    %v1615 = vpack.c.b16 %v1603, %v1602
    %v1616 = vpack.c.b16 %v1605, %v1604
    %v1617 = vpack.c.b16 %v1607, %v1606
    %v1618 = vpack.c.b16 %v1609, %v1608
    %v1619 = vpack.c.b16 %v1611, %v1610
    %1628 = vmatprep.subr.bf16.mxu0 0
    %1629 = vmatpush1.bf16.msra.mxu0 %v1619
    %1630 = vmatprep.subr.bf16.mxu0 0
    %1631 = vmatpush1.bf16.msra.mxu0 %v1618
    %1632 = vmatprep.subr.bf16.mxu0 0
    %1633 = vmatpush1.bf16.msra.mxu0 %v1617
    %1634 = vmatprep.subr.bf16.mxu0 0
    %1635 = vmatpush1.bf16.msra.mxu0 %v1616
    %1636 = vmatprep.subr.bf16.mxu0 0
    %1637 = vmatpush1.bf16.msra.mxu0 %v1615
    %1638 = vmatprep.subr.bf16.mxu0 0
    %1639 = vmatpush1.bf16.msra.mxu0 %v1614
    %1640 = vmatprep.subr.bf16.mxu0 0
    %1641 = vmatpush1.bf16.msra.mxu0 %v1613
    %1642 = vmatprep.subr.bf16.mxu0 0
    %1643 = vmatpush1.bf16.msra.mxu0 %v1612
    %1644 = vmatprep.subr.bf16.mxu0 0
    %1645 = vmatpush2.bf16.msra.mxu0 0
    %1646 = vmatprep.subr.bf16.mxu0 0
    %1647 = vmatpush2.bf16.msra.mxu0 0
    %1648 = vmatprep.subr.bf16.mxu0 0
    %1649 = vmatpush2.bf16.msra.mxu0 0
    %1650 = vmatprep.subr.bf16.mxu0 0
    %1651 = vmatpush2.bf16.msra.mxu0 0
    %1652 = vmatprep.subr.bf16.mxu0 0
    %1653 = vmatpush2.bf16.msra.mxu0 0
    %1654 = vmatprep.subr.bf16.mxu0 0
    %1655 = vmatpush2.bf16.msra.mxu0 0
    %1656 = vmatprep.subr.bf16.mxu0 0
    %1657 = vmatpush2.bf16.msra.mxu0 0
    %1658 = vmatprep.subr.bf16.mxu0 0
    %1659 = vmatpush2.bf16.msra.mxu0 0
    %1660 = vmatprep.mubr.bf16.mxu0 0
    %1661 = vmatmul.mubr.bf16.gmra.mxu0 %v1556
    %v1662 = vpop.f32.mrf.mxu0
    %v1663 = vadd.f32 %v1578, %v1662
    %v1664 = vpop.f32.mrf.mxu0
    %v1665 = vpop.f32.mrf.mxu0
    %v1666 = vpop.f32.mrf.mxu0
    %1667 = vdwg.mxu0
    %v1668 = vxor.u32 %v1663, 2147483648
    %v1669 = vmul.f32 %v1668, 1.442695
    %v1670 = vpow.pop %v1669
    %v1671 = vadd.f32 %v1670, 1.0
    %v1672 = vrcp.pop %v1671
    %v1673 = vmul.f32 1.0, %v1672
    %1674 = vst [vmem:[#allocation3] sm:$0xf] %v1673
    %v1675 = vld [vmem:[%s1] sm:$0xf]
    %v1676 = vmax.f32 %v1663, 0.0
    %v1677 = vmul.f32 %v1663, %v1675
    %v1678 = vsub.f32 %v1676, %v1677
    %v1679 = vand.u32 2147483647, %v1663
    %v1680 = vsub.f32 0.0, %v1679
    %v1681 = vmul.f32 %v1680, 1.442695
    %v1682 = vpow.pop %v1681
    %v1683 = vadd.f32 %v1682, 1.0
    %v1684 = vlog2.pop %v1683
    %v1685 = vmul.f32 %v1684, 0.6931472
    %v1686 = vmul.f32 -0.5, %v1682
    %v1687 = vadd.f32 %v1686, 1.0
    %v1688 = vmul.f32 %v1687, %v1682
    %v1689 = vand.u32 2147483647, %v1682
    %vm1690 = vcmp.lt.f32.partialorder %v1689, 0.0004427343
    %v1691 = vsel %vm1690, %v1688, %v1685
    %v1692 = vadd.f32 %v1678, %v1691
    %vm1693 = vcmask 60416
    %v1694 = vsel %vm1693, %v1692, 0.0
    %1695 = vadd.xlane.f32.xlu0 %v1694
    %v1696 = vpop.xlane.xlu0 %1695
    %v1697 = vrot.slane %v1696, 4
    %v1698 = vadd.f32 %v1696, %v1697
    %v1699 = vrot.slane %v1698, 2
    %v1700 = vadd.f32 %v1698, %v1699
    %v1701 = vrot.slane %v1700, 1
    %v1702 = vadd.f32 %v1700, %v1701
    %s1703 = vtos %v1702
    %s1704 = smul.f32 %s1703, 0.03125
    %s1705 = scalar_lea.smem [#allocation6], 0
    %1706 = sst [smem:[%s1705]] %s1704
    // Predicated region
    $region42: #{net_forward.1} parent=1 // pred_check
      _
    $region43: #{net_forward.1} parent=1 // pred_check_branch
      %1708 = sbr.rel (0) target = $region45
    $region44: #{net_forward.1} parent=1 // pred_region
      %s1710 = ssub.s32 64, 64
      %1711 = vsyncadd [#allocation4], %s1710
      %s1713 = sshll.u32 [#allocation3], 4
      %s1714 = int_to_ptr.vmem [resolvable:$true] %s1713
      %1716 = dma.vmem_to_hbm [thread:$0]  %s1714, 64, %s10, [#allocation4]
    $region45: #{net_forward.1} parent=1 // pred_fallthru
      _
    // Predicated region
    $region46: #{net_forward.1} parent=1 // pred_check
      _
    $region47: #{net_forward.1} parent=1 // pred_check_branch
      %1718 = sbr.rel (0) target = $region49
    $region48: #{net_forward.1} parent=1 // pred_region
      %s1720 = ssub.s32 16, 16
      %1721 = vsyncadd [#allocation5], %s1720
      %1724 = dma.smem_to_hbm [#allocation6], 16, %s11, [#allocation5]
    $region49: #{net_forward.1} parent=1 // pred_fallthru
      _
    // Predicated region
    $region50: #{net_forward.1} parent=1 // pred_check
      _
    $region51: #{net_forward.1} parent=1 // pred_check_branch
      %1726 = sbr.rel (0) target = $region53
    $region52: #{net_forward.1} parent=1 // pred_region
      %1727 = dma.done [#allocation4], 64
    $region53: #{net_forward.1} parent=1 // pred_fallthru
      _
    // Predicated region
    $region54: #{net_forward.1} parent=1 // pred_check
      _
    $region55: #{net_forward.1} parent=1 // pred_check_branch
      %1729 = sbr.rel (0) target = $region57
    $region56: #{net_forward.1} parent=1 // pred_region
      %1730 = dma.done [#allocation5], 16
    $region57: #{net_forward.1} parent=1 // pred_fallthru
      _
    %1731 = sfence
    %1732 = vsyncpa [#allocation4], 1
    %1733 = vsyncpa [#allocation5], 1

</llo_original>
